<compile_context>
chip_gen: v5e
topology: v5e:2x2
jax: 0.10.0
libtpu: 0.0.40
codegen_flags: <defaults>
</compile_context>

<pallas_src>
import math

import jax
import jax.numpy as jnp
from jax.experimental import pallas as pl
from jax.experimental.pallas import tpu as pltpu


def _round_up(x, m):
    return ((x + m - 1) // m) * m


# ---------------------------------------------------------------------------
# Kernel: one batch tile, both Q-heads fused.
#   layer 1: one wide matmul (both heads share LHS xa)
#   layer 2: one matmul per head
#   layer 3: both heads accumulate into one 128-lane output (q1 lane 0, q2 lane 1)
# ---------------------------------------------------------------------------
def critic_kernel(xa_ref,
                  w14_ref, b14_ref,
                  w2_ref, b2_ref, w5_ref, b5_ref,
                  w3_ref, b3_ref, w6_ref, b6_ref,
                  q_ref):
    H1_PAD = w2_ref.shape[0]            # static (512)

    xa = xa_ref[...]                    # (TB, IN_PAD) bf16, no in-kernel cast

    # Fused layer 1 for both heads: (TB, IN_PAD) @ (IN_PAD, 2*H1_PAD)
    h = jnp.dot(xa, w14_ref[...], preferred_element_type=jnp.float32) + b14_ref[...]
    h = jnp.maximum(h, 0.0).astype(jnp.bfloat16)

    h1 = h[:, :H1_PAD]                  # static, tile-aligned slices
    h2 = h[:, H1_PAD:]

    # Layer 2 per head
    h1 = jnp.maximum(jnp.dot(h1, w2_ref[...], preferred_element_type=jnp.float32)
                     + b2_ref[...], 0.0).astype(jnp.bfloat16)
    h2 = jnp.maximum(jnp.dot(h2, w5_ref[...], preferred_element_type=jnp.float32)
                     + b5_ref[...], 0.0).astype(jnp.bfloat16)

    # Layer 3: both heads land in the SAME 128-lane slab (disjoint lanes 0 / 1)
    q = jnp.dot(h1, w3_ref[...], preferred_element_type=jnp.float32) + b3_ref[...]
    q = q + jnp.dot(h2, w6_ref[...], preferred_element_type=jnp.float32) + b6_ref[...]
    q_ref[...] = q                      # single unmasked (TB, 128) f32 store


# ---------------------------------------------------------------------------
# Wrapper
# ---------------------------------------------------------------------------
_PARAM_ORDER = ("w14", "b14", "w2", "b2", "w5", "b5", "w3", "b3", "w6", "b6")
_SUB = 16   # sublane granule for the bf16 activation tile


def critic_forward(state, action, kparams, *, batch_tile=512):
    """state: (B, state_size), action: (B, action_size); returns (q1, q2), each (B, 1) f32."""
    B = state.shape[0]
    IN_PAD, H1_PAD2 = kparams["w14"].shape
    H2_PAD = kparams["w2"].shape[1]
    OUT_PAD = kparams["w3"].shape[1]

    # Build the padded activation slab directly in bf16 (no f32 materialization).
    xa = jnp.concatenate([state, action], axis=1).astype(jnp.bfloat16)
    in_dim = xa.shape[1]

    # Batch tile: multiple of 16 (bf16 sublane granule), capped at batch_tile,
    # and chosen so batches bigger than one granule give >= 2 grid steps
    # (so ("parallel",) shards across both v7x TensorCores).
    B_g = _round_up(max(B, _SUB), _SUB)
    TB = max(_SUB, _round_up(batch_tile, _SUB))
    if B_g > _SUB:
        TB = min(TB, _round_up(-(-B_g // 2), _SUB))
    else:
        TB = _SUB
    B_pad = _round_up(B_g, TB)
    grid = (B_pad // TB,)

    xa = jnp.pad(xa, ((0, B_pad - B), (0, IN_PAD - in_dim)))

    batch_map = lambda i: (i, 0)       # activation / output tiles walk the batch
    resident_map = lambda i: (0, 0)    # weights stay VMEM-resident (no re-DMA)

    weight_args = [kparams[k] for k in _PARAM_ORDER]
    weight_specs = [pl.BlockSpec(a.shape, resident_map) for a in weight_args]

    flops = int(2 * B_pad * (IN_PAD * H1_PAD2
                             + 2 * (H1_PAD2 // 2) * H2_PAD
                             + 2 * H2_PAD * OUT_PAD))
    bytes_accessed = int(sum(a.size * a.dtype.itemsize for a in weight_args)
                         + xa.size * xa.dtype.itemsize      # bf16 input slab
                         + B_pad * OUT_PAD * 4)             # single f32 output slab

    # TODO(synk): for tiny latency-critical batches (grid == 1) the ~0.6 MiB
    # up-front weight DMA dominates; streaming weights per-layer with manual
    # make_async_copy would hide part of it but is not implemented here.
    q = pl.pallas_call(
        critic_kernel,
        grid=grid,
        in_specs=[pl.BlockSpec((TB, IN_PAD), batch_map)] + weight_specs,
        out_specs=pl.BlockSpec((TB, OUT_PAD), batch_map),
        out_shape=jax.ShapeDtypeStruct((B_pad, OUT_PAD), jnp.float32),
        compiler_params=pltpu.CompilerParams(dimension_semantics=("parallel",)),
        cost_estimate=pl.CostEstimate(flops=flops, transcendentals=0,
                                      bytes_accessed=bytes_accessed),
    )(xa, *weight_args)

    return q[:B, 0:1], q[:B, 1:2]


# ---------------------------------------------------------------------------
# Parameter init (mimics nn.Linear default U(-1/sqrt(fan_in), 1/sqrt(fan_in)))
# ---------------------------------------------------------------------------
def init_critic_params(key, state_size, action_size, fc1_units=400, fc2_units=300):
    """Master f32 params, (in, out) layout, un-padded."""
    # TODO(synk): torch.manual_seed-identical init is not reproducible in JAX;
    # we use the same distribution with a JAX PRNG instead.
    in_dim = state_size + action_size
    keys = jax.random.split(key, 12)

    def linear(kw, kb, fan_in, fan_out):
        bound = 1.0 / math.sqrt(fan_in)
        w = jax.random.uniform(kw, (fan_in, fan_out), jnp.float32, -bound, bound)
        b = jax.random.uniform(kb, (fan_out,), jnp.float32, -bound, bound)
        return w, b

    dims = [(in_dim, fc1_units), (fc1_units, fc2_units), (fc2_units, 1)] * 2
    master = {}
    for idx, (name, (fi, fo)) in enumerate(zip("123456", dims)):
        w, b = linear(keys[2 * idx], keys[2 * idx + 1], fi, fo)
        master["w" + name] = w
        master["b" + name] = b
    return master


def pack_kernel_params(master, state_size, action_size, fc1_units=400, fc2_units=300):
    """Zero-pad to lane-dense shapes, cast weights to bf16, biases stay f32 (1, out).

    Packing layout:
      w14/b14 : layer-1 of both heads side-by-side along the output dim
                (head-1 columns [0:fc1), head-2 columns [H1_PAD:H1_PAD+fc1)).
      w3/b3   : real column at lane 0 of a shared 128-lane output.
      w6/b6   : real column at lane 1 of the same 128-lane output.
    """
    in_dim = state_size + action_size
    IN_PAD = _round_up(in_dim, 128)
    H1_PAD = _round_up(fc1_units, 128)
    H2_PAD = _round_up(fc2_units, 128)
    OUT_PAD = 128

    def pad_w(w, pi, po, col_off=0):
        fi, fo = w.shape
        return (jnp.zeros((pi, po), jnp.float32)
                .at[:fi, col_off:col_off + fo].set(w).astype(jnp.bfloat16))

    def pad_b(b, po, col_off=0):
        fo = b.shape[0]
        return jnp.zeros((1, po), jnp.float32).at[0, col_off:col_off + fo].set(b)

    packed = {}

    # Fused layer 1 (both heads).
    w14 = jnp.zeros((IN_PAD, 2 * H1_PAD), jnp.float32)
    w14 = w14.at[:in_dim, :fc1_units].set(master["w1"])
    w14 = w14.at[:in_dim, H1_PAD:H1_PAD + fc1_units].set(master["w4"])
    packed["w14"] = w14.astype(jnp.bfloat16)
    b14 = jnp.zeros((1, 2 * H1_PAD), jnp.float32)
    b14 = b14.at[0, :fc1_units].set(master["b1"])
    b14 = b14.at[0, H1_PAD:H1_PAD + fc1_units].set(master["b4"])
    packed["b14"] = b14

    # Layer 2 per head.
    packed["w2"] = pad_w(master["w2"], H1_PAD, H2_PAD)
    packed["b2"] = pad_b(master["b2"], H2_PAD)
    packed["w5"] = pad_w(master["w5"], H1_PAD, H2_PAD)
    packed["b5"] = pad_b(master["b5"], H2_PAD)

    # Layer 3: q1 -> lane 0, q2 -> lane 1 of a single shared output slab.
    packed["w3"] = pad_w(master["w3"], H2_PAD, OUT_PAD, col_off=0)
    packed["b3"] = pad_b(master["b3"], OUT_PAD, col_off=0)
    packed["w6"] = pad_w(master["w6"], H2_PAD, OUT_PAD, col_off=1)
    packed["b6"] = pad_b(master["b6"], OUT_PAD, col_off=1)
    return packed


# ---------------------------------------------------------------------------
# References
# ---------------------------------------------------------------------------
def critic_reference_f32(state, action, master):
    """Pure f32, un-padded — exact PyTorch-module semantics."""
    xa = jnp.concatenate([state, action], axis=1)

    def head(wa, ba, wb, bb, wc, bc):
        h = jnp.maximum(xa @ wa + ba, 0.0)
        h = jnp.maximum(h @ wb + bb, 0.0)
        return h @ wc + bc

    q1 = head(master["w1"], master["b1"], master["w2"], master["b2"],
              master["w3"], master["b3"])
    q2 = head(master["w4"], master["b4"], master["w5"], master["b5"],
              master["w6"], master["b6"])
    return q1, q2


def critic_reference_bf16(state, action, kparams):
    """Mimics the kernel's bf16 weight/activation casts (tight-tolerance check)."""
    IN_PAD = kparams["w14"].shape[0]
    H1_PAD = kparams["w2"].shape[0]
    xa = jnp.concatenate([state, action], axis=1).astype(jnp.bfloat16)
    xa = jnp.pad(xa, ((0, 0), (0, IN_PAD - xa.shape[1])))

    h = jnp.dot(xa, kparams["w14"], preferred_element_type=jnp.float32) + kparams["b14"]
    h = jnp.maximum(h, 0.0).astype(jnp.bfloat16)
    h1, h2 = h[:, :H1_PAD], h[:, H1_PAD:]
    h1 = jnp.maximum(jnp.dot(h1, kparams["w2"], preferred_element_type=jnp.float32)
                     + kparams["b2"], 0.0).astype(jnp.bfloat16)
    h2 = jnp.maximum(jnp.dot(h2, kparams["w5"], preferred_element_type=jnp.float32)
                     + kparams["b5"], 0.0).astype(jnp.bfloat16)
    q = (jnp.dot(h1, kparams["w3"], preferred_element_type=jnp.float32) + kparams["b3"]
         + jnp.dot(h2, kparams["w6"], preferred_element_type=jnp.float32) + kparams["b6"])
    return q[:, 0:1], q[:, 1:2]


if __name__ == "__main__":
    # BipedalWalkerHardcore sizes: state=24, action=4.
    state_size, action_size = 24, 4

    key = jax.random.PRNGKey(0)
    pkey, skey, akey = jax.random.split(key, 3)
    master = init_critic_params(pkey, state_size, action_size)
    kparams = pack_kernel_params(master, state_size, action_size)

    for B in (2, 37):   # tiny batch (grid=1) and an odd batch that forces grid=2
        sk, ak = jax.random.split(jax.random.fold_in(skey, B))
        state = jax.random.normal(sk, (B, state_size), dtype=jnp.float32)
        action = jnp.tanh(jax.random.normal(ak, (B, action_size), dtype=jnp.float32))

        q1, q2 = critic_forward(state, action, kparams)
        q1, q2 = jax.block_until_ready((q1, q2))
        assert q1.shape == (B, 1) and q2.shape == (B, 1)
        assert q1.dtype == jnp.float32 and q2.dtype == jnp.float32

        # Tight check: same bf16 quantization as the kernel.
        r1, r2 = critic_reference_bf16(state, action, kparams)
        assert jnp.allclose(q1, r1, atol=2e-3, rtol=2e-3)
        assert jnp.allclose(q2, r2, atol=2e-3, rtol=2e-3)

        # Semantic check vs. full-precision un-padded reference (bf16 tolerance).
        f1, f2 = critic_reference_f32(state, action, master)
        assert jnp.allclose(q1, f1, atol=5e-2, rtol=5e-2)
        assert jnp.allclose(q2, f2, atol=5e-2, rtol=5e-2)

    print("KERNEL_OK")
</pallas_src>

<mosaic_0001>
module attributes {stable_mosaic.version = 11 : i64} {
  func.func @critic_kernel(%arg0: i32, %arg1: memref<16x128xbf16, #tpu.memory_space<vmem>>, %arg2: memref<128x1024xbf16, #tpu.memory_space<vmem>>, %arg3: memref<1x1024xf32, #tpu.memory_space<vmem>>, %arg4: memref<512x384xbf16, #tpu.memory_space<vmem>>, %arg5: memref<1x384xf32, #tpu.memory_space<vmem>>, %arg6: memref<512x384xbf16, #tpu.memory_space<vmem>>, %arg7: memref<1x384xf32, #tpu.memory_space<vmem>>, %arg8: memref<384x128xbf16, #tpu.memory_space<vmem>>, %arg9: memref<1x128xf32, #tpu.memory_space<vmem>>, %arg10: memref<384x128xbf16, #tpu.memory_space<vmem>>, %arg11: memref<1x128xf32, #tpu.memory_space<vmem>>, %arg12: memref<16x128xf32, #tpu.memory_space<vmem>>) attributes {dimension_semantics = [#tpu.dimension_semantics<parallel>], iteration_bounds = array<i64: 1>, scalar_prefetch = 0 : i64, scratch_operands = 0 : i64, tpu.core_type = #tpu.core_type<tc>, window_params = [{transform_indices = @transform_0, window_bounds = array<i64: 16, 128>}, {pipeline_mode = #tpu.pipeline_mode<synchronous>, transform_indices = @transform_1, window_bounds = array<i64: 128, 1024>}, {pipeline_mode = #tpu.pipeline_mode<synchronous>, transform_indices = @transform_2, window_bounds = array<i64: 1, 1024>}, {pipeline_mode = #tpu.pipeline_mode<synchronous>, transform_indices = @transform_3, window_bounds = array<i64: 512, 384>}, {pipeline_mode = #tpu.pipeline_mode<synchronous>, transform_indices = @transform_4, window_bounds = array<i64: 1, 384>}, {pipeline_mode = #tpu.pipeline_mode<synchronous>, transform_indices = @transform_5, window_bounds = array<i64: 512, 384>}, {pipeline_mode = #tpu.pipeline_mode<synchronous>, transform_indices = @transform_6, window_bounds = array<i64: 1, 384>}, {pipeline_mode = #tpu.pipeline_mode<synchronous>, transform_indices = @transform_7, window_bounds = array<i64: 384, 128>}, {pipeline_mode = #tpu.pipeline_mode<synchronous>, transform_indices = @transform_8, window_bounds = array<i64: 1, 128>}, {pipeline_mode = #tpu.pipeline_mode<synchronous>, transform_indices = @transform_9, window_bounds = array<i64: 384, 128>}, {pipeline_mode = #tpu.pipeline_mode<synchronous>, transform_indices = @transform_10, window_bounds = array<i64: 1, 128>}, {transform_indices = @transform_11, window_bounds = array<i64: 16, 128>}]} {
    %c0 = arith.constant 0 : index
    %c0_0 = arith.constant 0 : index
    %0 = vector.load %arg1[%c0, %c0_0] : memref<16x128xbf16, #tpu.memory_space<vmem>>, vector<16x128xbf16>
    %c0_1 = arith.constant 0 : index
    %c0_2 = arith.constant 0 : index
    %1 = vector.load %arg2[%c0_1, %c0_2] : memref<128x1024xbf16, #tpu.memory_space<vmem>>, vector<128x1024xbf16>
    %cst = arith.constant dense<0.000000e+00> : vector<16x1024xf32>
    %2 = tpu.matmul %0, %1, %cst {dimension_numbers = #tpu.dot_dimension_numbers<[1], [0], [0], [1], [0, 0, 1, 1], [], []>} : vector<16x128xbf16>, vector<128x1024xbf16>, vector<16x1024xf32> -> vector<16x1024xf32>
    %c0_3 = arith.constant 0 : index
    %c0_4 = arith.constant 0 : index
    %3 = vector.load %arg3[%c0_3, %c0_4] : memref<1x1024xf32, #tpu.memory_space<vmem>>, vector<1x1024xf32>
    %4 = vector.broadcast %3 : vector<1x1024xf32> to vector<16x1024xf32>
    %5 = arith.addf %2, %4 : vector<16x1024xf32>
    %cst_5 = arith.constant 0.000000e+00 : f32
    %6 = vector.broadcast %cst_5 : f32 to vector<16x1024xf32>
    %7 = arith.maximumf %5, %6 : vector<16x1024xf32>
    %8 = arith.truncf %7 : vector<16x1024xf32> to vector<16x1024xbf16>
    %9 = vector.extract_strided_slice %8 {offsets = [0, 0], sizes = [16, 512], strides = [1, 1]} : vector<16x1024xbf16> to vector<16x512xbf16>
    %10 = vector.extract_strided_slice %8 {offsets = [0, 512], sizes = [16, 512], strides = [1, 1]} : vector<16x1024xbf16> to vector<16x512xbf16>
    %c0_6 = arith.constant 0 : index
    %c0_7 = arith.constant 0 : index
    %11 = vector.load %arg4[%c0_6, %c0_7] : memref<512x384xbf16, #tpu.memory_space<vmem>>, vector<512x384xbf16>
    %cst_8 = arith.constant dense<0.000000e+00> : vector<16x384xf32>
    %12 = tpu.matmul %9, %11, %cst_8 {dimension_numbers = #tpu.dot_dimension_numbers<[1], [0], [0], [1], [0, 0, 1, 1], [], []>} : vector<16x512xbf16>, vector<512x384xbf16>, vector<16x384xf32> -> vector<16x384xf32>
    %c0_9 = arith.constant 0 : index
    %c0_10 = arith.constant 0 : index
    %13 = vector.load %arg5[%c0_9, %c0_10] : memref<1x384xf32, #tpu.memory_space<vmem>>, vector<1x384xf32>
    %14 = vector.broadcast %13 : vector<1x384xf32> to vector<16x384xf32>
    %15 = arith.addf %12, %14 : vector<16x384xf32>
    %cst_11 = arith.constant 0.000000e+00 : f32
    %16 = vector.broadcast %cst_11 : f32 to vector<16x384xf32>
    %17 = arith.maximumf %15, %16 : vector<16x384xf32>
    %18 = arith.truncf %17 : vector<16x384xf32> to vector<16x384xbf16>
    %c0_12 = arith.constant 0 : index
    %c0_13 = arith.constant 0 : index
    %19 = vector.load %arg6[%c0_12, %c0_13] : memref<512x384xbf16, #tpu.memory_space<vmem>>, vector<512x384xbf16>
    %cst_14 = arith.constant dense<0.000000e+00> : vector<16x384xf32>
    %20 = tpu.matmul %10, %19, %cst_14 {dimension_numbers = #tpu.dot_dimension_numbers<[1], [0], [0], [1], [0, 0, 1, 1], [], []>} : vector<16x512xbf16>, vector<512x384xbf16>, vector<16x384xf32> -> vector<16x384xf32>
    %c0_15 = arith.constant 0 : index
    %c0_16 = arith.constant 0 : index
    %21 = vector.load %arg7[%c0_15, %c0_16] : memref<1x384xf32, #tpu.memory_space<vmem>>, vector<1x384xf32>
    %22 = vector.broadcast %21 : vector<1x384xf32> to vector<16x384xf32>
    %23 = arith.addf %20, %22 : vector<16x384xf32>
    %cst_17 = arith.constant 0.000000e+00 : f32
    %24 = vector.broadcast %cst_17 : f32 to vector<16x384xf32>
    %25 = arith.maximumf %23, %24 : vector<16x384xf32>
    %26 = arith.truncf %25 : vector<16x384xf32> to vector<16x384xbf16>
    %c0_18 = arith.constant 0 : index
    %c0_19 = arith.constant 0 : index
    %27 = vector.load %arg8[%c0_18, %c0_19] : memref<384x128xbf16, #tpu.memory_space<vmem>>, vector<384x128xbf16>
    %cst_20 = arith.constant dense<0.000000e+00> : vector<16x128xf32>
    %28 = tpu.matmul %18, %27, %cst_20 {dimension_numbers = #tpu.dot_dimension_numbers<[1], [0], [0], [1], [0, 0, 1, 1], [], []>} : vector<16x384xbf16>, vector<384x128xbf16>, vector<16x128xf32> -> vector<16x128xf32>
    %c0_21 = arith.constant 0 : index
    %c0_22 = arith.constant 0 : index
    %29 = vector.load %arg9[%c0_21, %c0_22] : memref<1x128xf32, #tpu.memory_space<vmem>>, vector<1x128xf32>
    %30 = vector.broadcast %29 : vector<1x128xf32> to vector<16x128xf32>
    %31 = arith.addf %28, %30 : vector<16x128xf32>
    %c0_23 = arith.constant 0 : index
    %c0_24 = arith.constant 0 : index
    %32 = vector.load %arg10[%c0_23, %c0_24] : memref<384x128xbf16, #tpu.memory_space<vmem>>, vector<384x128xbf16>
    %cst_25 = arith.constant dense<0.000000e+00> : vector<16x128xf32>
    %33 = tpu.matmul %26, %32, %cst_25 {dimension_numbers = #tpu.dot_dimension_numbers<[1], [0], [0], [1], [0, 0, 1, 1], [], []>} : vector<16x384xbf16>, vector<384x128xbf16>, vector<16x128xf32> -> vector<16x128xf32>
    %34 = arith.addf %31, %33 : vector<16x128xf32>
    %c0_26 = arith.constant 0 : index
    %c0_27 = arith.constant 0 : index
    %35 = vector.load %arg11[%c0_26, %c0_27] : memref<1x128xf32, #tpu.memory_space<vmem>>, vector<1x128xf32>
    %36 = vector.broadcast %35 : vector<1x128xf32> to vector<16x128xf32>
    %37 = arith.addf %34, %36 : vector<16x128xf32>
    %c0_28 = arith.constant 0 : index
    %c0_29 = arith.constant 0 : index
    %38 = vector.load %arg12[%c0_28, %c0_29] : memref<16x128xf32, #tpu.memory_space<vmem>>, vector<16x128xf32>
    tpu.vector_store %arg12[%c0_28, %c0_29], %37 {strides = array<i32>} : memref<16x128xf32, #tpu.memory_space<vmem>>, vector<16x128xf32>,
    return
  }
  func.func @transform_0(%arg0: i32) -> (i32, i32) {
    %c0_i32 = arith.constant 0 : i32
    %c0_i32_0 = arith.constant 0 : i32
    return %arg0, %c0_i32 : i32, i32
  }
  func.func @transform_1(%arg0: i32) -> (i32, i32) {
    %c0_i32 = arith.constant 0 : i32
    %c0_i32_0 = arith.constant 0 : i32
    %c0_i32_1 = arith.constant 0 : i32
    return %c0_i32, %c0_i32_0 : i32, i32
  }
  func.func @transform_2(%arg0: i32) -> (i32, i32) {
    %c0_i32 = arith.constant 0 : i32
    %c0_i32_0 = arith.constant 0 : i32
    %c0_i32_1 = arith.constant 0 : i32
    return %c0_i32, %c0_i32_0 : i32, i32
  }
  func.func @transform_3(%arg0: i32) -> (i32, i32) {
    %c0_i32 = arith.constant 0 : i32
    %c0_i32_0 = arith.constant 0 : i32
    %c0_i32_1 = arith.constant 0 : i32
    return %c0_i32, %c0_i32_0 : i32, i32
  }
  func.func @transform_4(%arg0: i32) -> (i32, i32) {
    %c0_i32 = arith.constant 0 : i32
    %c0_i32_0 = arith.constant 0 : i32
    %c0_i32_1 = arith.constant 0 : i32
    return %c0_i32, %c0_i32_0 : i32, i32
  }
  func.func @transform_5(%arg0: i32) -> (i32, i32) {
    %c0_i32 = arith.constant 0 : i32
    %c0_i32_0 = arith.constant 0 : i32
    %c0_i32_1 = arith.constant 0 : i32
    return %c0_i32, %c0_i32_0 : i32, i32
  }
  func.func @transform_6(%arg0: i32) -> (i32, i32) {
    %c0_i32 = arith.constant 0 : i32
    %c0_i32_0 = arith.constant 0 : i32
    %c0_i32_1 = arith.constant 0 : i32
    return %c0_i32, %c0_i32_0 : i32, i32
  }
  func.func @transform_7(%arg0: i32) -> (i32, i32) {
    %c0_i32 = arith.constant 0 : i32
    %c0_i32_0 = arith.constant 0 : i32
    %c0_i32_1 = arith.constant 0 : i32
    return %c0_i32, %c0_i32_0 : i32, i32
  }
  func.func @transform_8(%arg0: i32) -> (i32, i32) {
    %c0_i32 = arith.constant 0 : i32
    %c0_i32_0 = arith.constant 0 : i32
    %c0_i32_1 = arith.constant 0 : i32
    return %c0_i32, %c0_i32_0 : i32, i32
  }
  func.func @transform_9(%arg0: i32) -> (i32, i32) {
    %c0_i32 = arith.constant 0 : i32
    %c0_i32_0 = arith.constant 0 : i32
    %c0_i32_1 = arith.constant 0 : i32
    return %c0_i32, %c0_i32_0 : i32, i32
  }
  func.func @transform_10(%arg0: i32) -> (i32, i32) {
    %c0_i32 = arith.constant 0 : i32
    %c0_i32_0 = arith.constant 0 : i32
    %c0_i32_1 = arith.constant 0 : i32
    return %c0_i32, %c0_i32_0 : i32, i32
  }
  func.func @transform_11(%arg0: i32) -> (i32, i32) {
    %c0_i32 = arith.constant 0 : i32
    %c0_i32_0 = arith.constant 0 : i32
    return %arg0, %c0_i32 : i32, i32
  }
}

</mosaic_0001>

<llo_original>
// kernel: tpu_custom_call.1
$region0: #{tpu_custom_call.1}
  #allocation0 [shape = 'u32[]', space=smem, size = 0x4, offset = 0x4, fixed_abs, tag = 'smem constant byte address 0x4 - core index']
  #allocation1 [shape = 'u32[72,128]{1,0:T(1,128)}', space=vmem, size = 0x9000, scoped, tag = 'internal scratch']
  %s0 = inlined_call_operand.hbm [shape: bf16[16,128], index: 0, kind: input, shape index: {}]
  %s1 = inlined_call_operand.hbm [shape: bf16[128,1024], index: 1, kind: input, shape index: {}]
  %s2 = inlined_call_operand.hbm [shape: f32[1,1024], index: 2, kind: input, shape index: {}]
  %s3 = inlined_call_operand.hbm [shape: bf16[512,384], index: 3, kind: input, shape index: {}]
  %s4 = inlined_call_operand.vmem [shape: f32[1,384], index: 4, kind: input, shape index: {}]
  %s5 = inlined_call_operand.hbm [shape: bf16[512,384], index: 5, kind: input, shape index: {}]
  %s6 = inlined_call_operand.hbm [shape: f32[1,384], index: 6, kind: input, shape index: {}]
  %s7 = inlined_call_operand.hbm [shape: bf16[384,128], index: 7, kind: input, shape index: {}]
  %s8 = inlined_call_operand.vmem [shape: f32[1,128], index: 8, kind: input, shape index: {}]
  %s9 = inlined_call_operand.hbm [shape: bf16[384,128], index: 9, kind: input, shape index: {}]
  %s10 = inlined_call_operand.vmem [shape: f32[1,128], index: 10, kind: input, shape index: {}]
  %s11 = inlined_call_operand.hbm [shape: f32[16,128], index: 11, kind: output, shape index: {}]
  %s12 = sld [smem:[#allocation0]]
  $region86: #{tpu_custom_call.1} parent=0
    _
  %s14 = ssub.s32 1, %s12
  %s15 = scalar_select 0, %s14, %s12
  $region1: #{tpu_custom_call.1} parent=0
    #allocation2 [shape = 'u8[4096]{0}', space=vmem, size = 0x1000, scoped, tag = 'input window, operand 0, single buffered']
    #allocation3 [shape = 's32[1]{0}', space=sflag, size = 0x4, scoped, tag = 'scoped memory for tpu_custom_call.1']
    #allocation4 [shape = 's32[1]{0}', space=sflag, size = 0x4, scoped, tag = 'scoped memory for tpu_custom_call.1']
    #allocation5 [shape = 'u8[262144]{0}', space=vmem, size = 0x40000, scoped, tag = 'input window, operand 1, single buffered']
    #allocation6 [shape = 's32[1]{0}', space=sflag, size = 0x4, scoped, tag = 'scoped memory for tpu_custom_call.1']
    #allocation7 [shape = 'u8[4096]{0}', space=vmem, size = 0x1000, scoped, tag = 'input window, operand 2, single buffered']
    #allocation8 [shape = 'u8[393216]{0}', space=vmem, size = 0x60000, scoped, tag = 'input window, operand 3, single buffered']
    #allocation9 [shape = 's32[1]{0}', space=sflag, size = 0x4, scoped, tag = 'scoped memory for tpu_custom_call.1']
    #allocation10 [shape = 'u8[393216]{0}', space=vmem, size = 0x60000, scoped, tag = 'input window, operand 5, single buffered']
    #allocation11 [shape = 'u8[1536]{0}', space=vmem, size = 0x800, scoped, tag = 'input window, operand 6, single buffered']
    #allocation12 [shape = 's32[1]{0}', space=sflag, size = 0x4, scoped, tag = 'scoped memory for tpu_custom_call.1']
    #allocation13 [shape = 'u8[98304]{0}', space=vmem, size = 0x18000, scoped, tag = 'input window, operand 7, single buffered']
    #allocation14 [shape = 'u8[98304]{0}', space=vmem, size = 0x18000, scoped, tag = 'input window, operand 9, single buffered']
    #allocation15 [shape = 's32[1]{0}', space=sflag, size = 0x4, scoped, tag = 'scoped memory for tpu_custom_call.1']
    #allocation16 [shape = 'u8[8192]{0}', space=vmem, size = 0x2000, scoped, tag = 'output window, operand 0, single buffered']
    %16 = vsyncpa [#allocation3], 0
    %17 = vsyncpa [#allocation6], 0
    %18 = vsyncpa [#allocation9], 0
    %19 = vsyncpa [#allocation12], 0
    %20 = vsyncpa [#allocation15], 0
    %21 = vsyncpa [#allocation4], 0
    // Predicated region
    $region2: #{tpu_custom_call.1} parent=1 // pred_check
      _
    $region3: #{tpu_custom_call.1} parent=1 // pred_check_branch
      %23 = sbr.rel (0) target = $region5
    $region4: #{tpu_custom_call.1} parent=1 // pred_region
      %25 = vsyncadd [#allocation3], 0
      %s26 = sshll.u32 %s0, 4
      %s27 = int_to_ptr.hbm [resolvable:$true] %s26
      %s28 = sshll.u32 [#allocation2], 4
      %s29 = int_to_ptr.vmem [resolvable:$true] %s28
      %34 = dma.hbm_to_vmem [thread:$0]  %s27, 128, %s29, [#allocation3], 64, 64, 4
    $region5: #{tpu_custom_call.1} parent=1 // pred_fallthru
      _
    // Predicated region
    $region6: #{tpu_custom_call.1} parent=1 // pred_check
      _
    $region7: #{tpu_custom_call.1} parent=1 // pred_check_branch
      %36 = sbr.rel (0) target = $region9
    $region8: #{tpu_custom_call.1} parent=1 // pred_region
      %38 = vsyncadd [#allocation6], 0
      %s39 = sshll.u32 %s1, 4
      %s40 = int_to_ptr.hbm [resolvable:$true] %s39
      %s41 = sshll.u32 [#allocation5], 4
      %s42 = int_to_ptr.vmem [resolvable:$true] %s41
      %47 = dma.hbm_to_vmem [thread:$0]  %s40, 8192, %s42, [#allocation6], 512, 512, 32
    $region9: #{tpu_custom_call.1} parent=1 // pred_fallthru
      _
    // Predicated region
    $region10: #{tpu_custom_call.1} parent=1 // pred_check
      _
    $region11: #{tpu_custom_call.1} parent=1 // pred_check_branch
      %49 = sbr.rel (0) target = $region13
    $region12: #{tpu_custom_call.1} parent=1 // pred_region
      %51 = vsyncadd [#allocation6], 0
      %s53 = sshll.u32 %s2, 4
      %s54 = int_to_ptr.hbm [resolvable:$true] %s53
      %s55 = sshll.u32 [#allocation7], 4
      %s56 = int_to_ptr.vmem [resolvable:$true] %s55
      %58 = dma.hbm_to_vmem [thread:$0]  %s54, 128, %s56, [#allocation6]
    $region13: #{tpu_custom_call.1} parent=1 // pred_fallthru
      _
    // Predicated region
    $region14: #{tpu_custom_call.1} parent=1 // pred_check
      _
    $region15: #{tpu_custom_call.1} parent=1 // pred_check_branch
      %60 = sbr.rel (0) target = $region17
    $region16: #{tpu_custom_call.1} parent=1 // pred_region
      %62 = vsyncadd [#allocation9], 0
      %s63 = sshll.u32 %s3, 4
      %s64 = int_to_ptr.hbm [resolvable:$true] %s63
      %s65 = sshll.u32 [#allocation8], 4
      %s66 = int_to_ptr.vmem [resolvable:$true] %s65
      %71 = dma.hbm_to_vmem [thread:$0]  %s64, 12288, %s66, [#allocation9], 192, 192, 12
    $region17: #{tpu_custom_call.1} parent=1 // pred_fallthru
      _
    // Predicated region
    $region18: #{tpu_custom_call.1} parent=1 // pred_check
      _
    $region19: #{tpu_custom_call.1} parent=1 // pred_check_branch
      %73 = sbr.rel (0) target = $region21
    $region20: #{tpu_custom_call.1} parent=1 // pred_region
      _
    $region21: #{tpu_custom_call.1} parent=1 // pred_fallthru
      _
    // Predicated region
    $region22: #{tpu_custom_call.1} parent=1 // pred_check
      _
    $region23: #{tpu_custom_call.1} parent=1 // pred_check_branch
      %75 = sbr.rel (0) target = $region25
    $region24: #{tpu_custom_call.1} parent=1 // pred_region
      %77 = vsyncadd [#allocation9], 0
      %s78 = sshll.u32 %s5, 4
      %s79 = int_to_ptr.hbm [resolvable:$true] %s78
      %s80 = sshll.u32 [#allocation10], 4
      %s81 = int_to_ptr.vmem [resolvable:$true] %s80
      %86 = dma.hbm_to_vmem [thread:$0]  %s79, 12288, %s81, [#allocation9], 192, 192, 12
    $region25: #{tpu_custom_call.1} parent=1 // pred_fallthru
      _
    // Predicated region
    $region26: #{tpu_custom_call.1} parent=1 // pred_check
      _
    $region27: #{tpu_custom_call.1} parent=1 // pred_check_branch
      %88 = sbr.rel (0) target = $region29
    $region28: #{tpu_custom_call.1} parent=1 // pred_region
      %90 = vsyncadd [#allocation12], 0
      %s92 = sshll.u32 %s6, 4
      %s93 = int_to_ptr.hbm [resolvable:$true] %s92
      %s94 = sshll.u32 [#allocation11], 4
      %s95 = int_to_ptr.vmem [resolvable:$true] %s94
      %97 = dma.hbm_to_vmem [thread:$0]  %s93, 48, %s95, [#allocation12]
    $region29: #{tpu_custom_call.1} parent=1 // pred_fallthru
      _
    // Predicated region
    $region30: #{tpu_custom_call.1} parent=1 // pred_check
      _
    $region31: #{tpu_custom_call.1} parent=1 // pred_check_branch
      %99 = sbr.rel (0) target = $region33
    $region32: #{tpu_custom_call.1} parent=1 // pred_region
      %101 = vsyncadd [#allocation12], 0
      %s102 = sshll.u32 %s7, 4
      %s103 = int_to_ptr.hbm [resolvable:$true] %s102
      %s104 = sshll.u32 [#allocation13], 4
      %s105 = int_to_ptr.vmem [resolvable:$true] %s104
      %110 = dma.hbm_to_vmem [thread:$0]  %s103, 3072, %s105, [#allocation12], 64, 64, 4
    $region33: #{tpu_custom_call.1} parent=1 // pred_fallthru
      _
    // Predicated region
    $region34: #{tpu_custom_call.1} parent=1 // pred_check
      _
    $region35: #{tpu_custom_call.1} parent=1 // pred_check_branch
      %112 = sbr.rel (0) target = $region37
    $region36: #{tpu_custom_call.1} parent=1 // pred_region
      _
    $region37: #{tpu_custom_call.1} parent=1 // pred_fallthru
      _
    // Predicated region
    $region38: #{tpu_custom_call.1} parent=1 // pred_check
      _
    $region39: #{tpu_custom_call.1} parent=1 // pred_check_branch
      %114 = sbr.rel (0) target = $region41
    $region40: #{tpu_custom_call.1} parent=1 // pred_region
      %116 = vsyncadd [#allocation15], 0
      %s117 = sshll.u32 %s9, 4
      %s118 = int_to_ptr.hbm [resolvable:$true] %s117
      %s119 = sshll.u32 [#allocation14], 4
      %s120 = int_to_ptr.vmem [resolvable:$true] %s119
      %125 = dma.hbm_to_vmem [thread:$0]  %s118, 3072, %s120, [#allocation15], 64, 64, 4
    $region41: #{tpu_custom_call.1} parent=1 // pred_fallthru
      _
    // Predicated region
    $region42: #{tpu_custom_call.1} parent=1 // pred_check
      _
    $region43: #{tpu_custom_call.1} parent=1 // pred_check_branch
      %127 = sbr.rel (0) target = $region45
    $region44: #{tpu_custom_call.1} parent=1 // pred_region
      _
    $region45: #{tpu_custom_call.1} parent=1 // pred_fallthru
      _
    // Predicated region
    $region46: #{tpu_custom_call.1} parent=1 // pred_check
      _
    $region47: #{tpu_custom_call.1} parent=1 // pred_check_branch
      %129 = sbr.rel (0) target = $region49
    $region48: #{tpu_custom_call.1} parent=1 // pred_region
      %131 = dma.done [#allocation3], 128
    $region49: #{tpu_custom_call.1} parent=1 // pred_fallthru
      _
    // Predicated region
    $region50: #{tpu_custom_call.1} parent=1 // pred_check
      _
    $region51: #{tpu_custom_call.1} parent=1 // pred_check_branch
      %133 = sbr.rel (0) target = $region53
    $region52: #{tpu_custom_call.1} parent=1 // pred_region
      %135 = dma.done [#allocation6], 8192
    $region53: #{tpu_custom_call.1} parent=1 // pred_fallthru
      _
    // Predicated region
    $region54: #{tpu_custom_call.1} parent=1 // pred_check
      _
    $region55: #{tpu_custom_call.1} parent=1 // pred_check_branch
      %137 = sbr.rel (0) target = $region57
    $region56: #{tpu_custom_call.1} parent=1 // pred_region
      %139 = dma.done [#allocation6], 128
    $region57: #{tpu_custom_call.1} parent=1 // pred_fallthru
      _
    // Predicated region
    $region58: #{tpu_custom_call.1} parent=1 // pred_check
      _
    $region59: #{tpu_custom_call.1} parent=1 // pred_check_branch
      %141 = sbr.rel (0) target = $region61
    $region60: #{tpu_custom_call.1} parent=1 // pred_region
      %143 = dma.done [#allocation9], 12288
    $region61: #{tpu_custom_call.1} parent=1 // pred_fallthru
      _
    // Predicated region
    $region62: #{tpu_custom_call.1} parent=1 // pred_check
      _
    $region63: #{tpu_custom_call.1} parent=1 // pred_check_branch
      %145 = sbr.rel (0) target = $region65
    $region64: #{tpu_custom_call.1} parent=1 // pred_region
      %147 = dma.done [#allocation9], 12288
    $region65: #{tpu_custom_call.1} parent=1 // pred_fallthru
      _
    // Predicated region
    $region66: #{tpu_custom_call.1} parent=1 // pred_check
      _
    $region67: #{tpu_custom_call.1} parent=1 // pred_check_branch
      %149 = sbr.rel (0) target = $region69
    $region68: #{tpu_custom_call.1} parent=1 // pred_region
      %151 = dma.done [#allocation12], 48
    $region69: #{tpu_custom_call.1} parent=1 // pred_fallthru
      _
    // Predicated region
    $region70: #{tpu_custom_call.1} parent=1 // pred_check
      _
    $region71: #{tpu_custom_call.1} parent=1 // pred_check_branch
      %153 = sbr.rel (0) target = $region73
    $region72: #{tpu_custom_call.1} parent=1 // pred_region
      %155 = dma.done [#allocation12], 3072
    $region73: #{tpu_custom_call.1} parent=1 // pred_fallthru
      _
    // Predicated region
    $region74: #{tpu_custom_call.1} parent=1 // pred_check
      _
    $region75: #{tpu_custom_call.1} parent=1 // pred_check_branch
      %157 = sbr.rel (0) target = $region77
    $region76: #{tpu_custom_call.1} parent=1 // pred_region
      %159 = dma.done [#allocation15], 3072
    $region77: #{tpu_custom_call.1} parent=1 // pred_fallthru
      _
    %v160 = vld [vmem:[#allocation2] sm:$0xf]
    %v161 = vld [vmem:[#allocation2 + $0x4] sm:$0xf]
    %v162 = vld [vmem:[#allocation5] sm:$0xff]
    %v163 = vld [vmem:[#allocation5 + $0x8] sm:$0xff]
    %v164 = vld [vmem:[#allocation5 + $0x10] sm:$0xff]
    %v165 = vld [vmem:[#allocation5 + $0x18] sm:$0xff]
    %v166 = vld [vmem:[#allocation5 + $0x20] sm:$0xff]
    %v167 = vld [vmem:[#allocation5 + $0x28] sm:$0xff]
    %v168 = vld [vmem:[#allocation5 + $0x30] sm:$0xff]
    %v169 = vld [vmem:[#allocation5 + $0x38] sm:$0xff]
    %v170 = vld [vmem:[#allocation5 + $0x40] sm:$0xff]
    %v171 = vld [vmem:[#allocation5 + $0x48] sm:$0xff]
    %v172 = vld [vmem:[#allocation5 + $0x50] sm:$0xff]
    %v173 = vld [vmem:[#allocation5 + $0x58] sm:$0xff]
    %v174 = vld [vmem:[#allocation5 + $0x60] sm:$0xff]
    %v175 = vld [vmem:[#allocation5 + $0x68] sm:$0xff]
    %v176 = vld [vmem:[#allocation5 + $0x70] sm:$0xff]
    %v177 = vld [vmem:[#allocation5 + $0x78] sm:$0xff]
    %v178 = vld [vmem:[#allocation5 + $0x80] sm:$0xff]
    %v179 = vld [vmem:[#allocation5 + $0x88] sm:$0xff]
    %v180 = vld [vmem:[#allocation5 + $0x90] sm:$0xff]
    %v181 = vld [vmem:[#allocation5 + $0x98] sm:$0xff]
    %v182 = vld [vmem:[#allocation5 + $0xa0] sm:$0xff]
    %v183 = vld [vmem:[#allocation5 + $0xa8] sm:$0xff]
    %v184 = vld [vmem:[#allocation5 + $0xb0] sm:$0xff]
    %v185 = vld [vmem:[#allocation5 + $0xb8] sm:$0xff]
    %v186 = vld [vmem:[#allocation5 + $0xc0] sm:$0xff]
    %v187 = vld [vmem:[#allocation5 + $0xc8] sm:$0xff]
    %v188 = vld [vmem:[#allocation5 + $0xd0] sm:$0xff]
    %v189 = vld [vmem:[#allocation5 + $0xd8] sm:$0xff]
    %v190 = vld [vmem:[#allocation5 + $0xe0] sm:$0xff]
    %v191 = vld [vmem:[#allocation5 + $0xe8] sm:$0xff]
    %v192 = vld [vmem:[#allocation5 + $0xf0] sm:$0xff]
    %v193 = vld [vmem:[#allocation5 + $0xf8] sm:$0xff]
    %v194 = vld [vmem:[#allocation5 + $0x100] sm:$0xff]
    %v195 = vld [vmem:[#allocation5 + $0x108] sm:$0xff]
    %v196 = vld [vmem:[#allocation5 + $0x110] sm:$0xff]
    %v197 = vld [vmem:[#allocation5 + $0x118] sm:$0xff]
    %v198 = vld [vmem:[#allocation5 + $0x120] sm:$0xff]
    %v199 = vld [vmem:[#allocation5 + $0x128] sm:$0xff]
    %v200 = vld [vmem:[#allocation5 + $0x130] sm:$0xff]
    %v201 = vld [vmem:[#allocation5 + $0x138] sm:$0xff]
    %v202 = vld [vmem:[#allocation5 + $0x140] sm:$0xff]
    %v203 = vld [vmem:[#allocation5 + $0x148] sm:$0xff]
    %v204 = vld [vmem:[#allocation5 + $0x150] sm:$0xff]
    %v205 = vld [vmem:[#allocation5 + $0x158] sm:$0xff]
    %v206 = vld [vmem:[#allocation5 + $0x160] sm:$0xff]
    %v207 = vld [vmem:[#allocation5 + $0x168] sm:$0xff]
    %v208 = vld [vmem:[#allocation5 + $0x170] sm:$0xff]
    %v209 = vld [vmem:[#allocation5 + $0x178] sm:$0xff]
    %v210 = vld [vmem:[#allocation5 + $0x180] sm:$0xff]
    %v211 = vld [vmem:[#allocation5 + $0x188] sm:$0xff]
    %v212 = vld [vmem:[#allocation5 + $0x190] sm:$0xff]
    %v213 = vld [vmem:[#allocation5 + $0x198] sm:$0xff]
    %v214 = vld [vmem:[#allocation5 + $0x1a0] sm:$0xff]
    %v215 = vld [vmem:[#allocation5 + $0x1a8] sm:$0xff]
    %v216 = vld [vmem:[#allocation5 + $0x1b0] sm:$0xff]
    %v217 = vld [vmem:[#allocation5 + $0x1b8] sm:$0xff]
    %v218 = vld [vmem:[#allocation5 + $0x1c0] sm:$0xff]
    %v219 = vld [vmem:[#allocation5 + $0x1c8] sm:$0xff]
    %v220 = vld [vmem:[#allocation5 + $0x1d0] sm:$0xff]
    %v221 = vld [vmem:[#allocation5 + $0x1d8] sm:$0xff]
    %v222 = vld [vmem:[#allocation5 + $0x1e0] sm:$0xff]
    %v223 = vld [vmem:[#allocation5 + $0x1e8] sm:$0xff]
    %v224 = vld [vmem:[#allocation5 + $0x1f0] sm:$0xff]
    %v225 = vld [vmem:[#allocation5 + $0x1f8] sm:$0xff]
    %v226 = vld [vmem:[#allocation7] sm:$0xff]
    %v228 = vperm.slane %v226, 0
    %v229 = vperm.slane %v226, 1
    %v230 = vperm.slane %v226, 2
    %v231 = vperm.slane %v226, 3
    %v232 = vperm.slane %v226, 4
    %v233 = vperm.slane %v226, 5
    %v234 = vperm.slane %v226, 6
    %v235 = vperm.slane %v226, 7
    %v246 = vunpack.c.l.b16 %v160
    %v247 = vunpack.c.l.b16 %v161
    %v248 = vpack.c.b16 %v247, %v246
    %v314 = vunpack.c.l.b16 %v162
    %v315 = vunpack.c.h.b16 %v162
    %v316 = vunpack.c.l.b16 %v163
    %v317 = vunpack.c.h.b16 %v163
    %v318 = vunpack.c.l.b16 %v164
    %v319 = vunpack.c.h.b16 %v164
    %v320 = vunpack.c.l.b16 %v165
    %v321 = vunpack.c.h.b16 %v165
    %v322 = vunpack.c.l.b16 %v166
    %v323 = vunpack.c.h.b16 %v166
    %v324 = vunpack.c.l.b16 %v167
    %v325 = vunpack.c.h.b16 %v167
    %v326 = vunpack.c.l.b16 %v168
    %v327 = vunpack.c.h.b16 %v168
    %v328 = vunpack.c.l.b16 %v169
    %v329 = vunpack.c.h.b16 %v169
    %v330 = vunpack.c.l.b16 %v170
    %v331 = vunpack.c.h.b16 %v170
    %v332 = vunpack.c.l.b16 %v171
    %v333 = vunpack.c.h.b16 %v171
    %v334 = vunpack.c.l.b16 %v172
    %v335 = vunpack.c.h.b16 %v172
    %v336 = vunpack.c.l.b16 %v173
    %v337 = vunpack.c.h.b16 %v173
    %v338 = vunpack.c.l.b16 %v174
    %v339 = vunpack.c.h.b16 %v174
    %v340 = vunpack.c.l.b16 %v175
    %v341 = vunpack.c.h.b16 %v175
    %v342 = vunpack.c.l.b16 %v176
    %v343 = vunpack.c.h.b16 %v176
    %v344 = vunpack.c.l.b16 %v177
    %v345 = vunpack.c.h.b16 %v177
    %v346 = vunpack.c.l.b16 %v178
    %v347 = vunpack.c.h.b16 %v178
    %v348 = vunpack.c.l.b16 %v179
    %v349 = vunpack.c.h.b16 %v179
    %v350 = vunpack.c.l.b16 %v180
    %v351 = vunpack.c.h.b16 %v180
    %v352 = vunpack.c.l.b16 %v181
    %v353 = vunpack.c.h.b16 %v181
    %v354 = vunpack.c.l.b16 %v182
    %v355 = vunpack.c.h.b16 %v182
    %v356 = vunpack.c.l.b16 %v183
    %v357 = vunpack.c.h.b16 %v183
    %v358 = vunpack.c.l.b16 %v184
    %v359 = vunpack.c.h.b16 %v184
    %v360 = vunpack.c.l.b16 %v185
    %v361 = vunpack.c.h.b16 %v185
    %v362 = vunpack.c.l.b16 %v186
    %v363 = vunpack.c.h.b16 %v186
    %v364 = vunpack.c.l.b16 %v187
    %v365 = vunpack.c.h.b16 %v187
    %v366 = vunpack.c.l.b16 %v188
    %v367 = vunpack.c.h.b16 %v188
    %v368 = vunpack.c.l.b16 %v189
    %v369 = vunpack.c.h.b16 %v189
    %v370 = vunpack.c.l.b16 %v190
    %v371 = vunpack.c.h.b16 %v190
    %v372 = vunpack.c.l.b16 %v191
    %v373 = vunpack.c.h.b16 %v191
    %v374 = vunpack.c.l.b16 %v192
    %v375 = vunpack.c.h.b16 %v192
    %v376 = vunpack.c.l.b16 %v193
    %v377 = vunpack.c.h.b16 %v193
    %v378 = vunpack.c.l.b16 %v194
    %v379 = vunpack.c.h.b16 %v194
    %v380 = vunpack.c.l.b16 %v195
    %v381 = vunpack.c.h.b16 %v195
    %v382 = vunpack.c.l.b16 %v196
    %v383 = vunpack.c.h.b16 %v196
    %v384 = vunpack.c.l.b16 %v197
    %v385 = vunpack.c.h.b16 %v197
    %v386 = vunpack.c.l.b16 %v198
    %v387 = vunpack.c.h.b16 %v198
    %v388 = vunpack.c.l.b16 %v199
    %v389 = vunpack.c.h.b16 %v199
    %v390 = vunpack.c.l.b16 %v200
    %v391 = vunpack.c.h.b16 %v200
    %v392 = vunpack.c.l.b16 %v201
    %v393 = vunpack.c.h.b16 %v201
    %v394 = vunpack.c.l.b16 %v202
    %v395 = vunpack.c.h.b16 %v202
    %v396 = vunpack.c.l.b16 %v203
    %v397 = vunpack.c.h.b16 %v203
    %v398 = vunpack.c.l.b16 %v204
    %v399 = vunpack.c.h.b16 %v204
    %v400 = vunpack.c.l.b16 %v205
    %v401 = vunpack.c.h.b16 %v205
    %v402 = vunpack.c.l.b16 %v206
    %v403 = vunpack.c.h.b16 %v206
    %v404 = vunpack.c.l.b16 %v207
    %v405 = vunpack.c.h.b16 %v207
    %v406 = vunpack.c.l.b16 %v208
    %v407 = vunpack.c.h.b16 %v208
    %v408 = vunpack.c.l.b16 %v209
    %v409 = vunpack.c.h.b16 %v209
    %v410 = vunpack.c.l.b16 %v210
    %v411 = vunpack.c.h.b16 %v210
    %v412 = vunpack.c.l.b16 %v211
    %v413 = vunpack.c.h.b16 %v211
    %v414 = vunpack.c.l.b16 %v212
    %v415 = vunpack.c.h.b16 %v212
    %v416 = vunpack.c.l.b16 %v213
    %v417 = vunpack.c.h.b16 %v213
    %v418 = vunpack.c.l.b16 %v214
    %v419 = vunpack.c.h.b16 %v214
    %v420 = vunpack.c.l.b16 %v215
    %v421 = vunpack.c.h.b16 %v215
    %v422 = vunpack.c.l.b16 %v216
    %v423 = vunpack.c.h.b16 %v216
    %v424 = vunpack.c.l.b16 %v217
    %v425 = vunpack.c.h.b16 %v217
    %v426 = vunpack.c.l.b16 %v218
    %v427 = vunpack.c.h.b16 %v218
    %v428 = vunpack.c.l.b16 %v219
    %v429 = vunpack.c.h.b16 %v219
    %v430 = vunpack.c.l.b16 %v220
    %v431 = vunpack.c.h.b16 %v220
    %v432 = vunpack.c.l.b16 %v221
    %v433 = vunpack.c.h.b16 %v221
    %v434 = vunpack.c.l.b16 %v222
    %v435 = vunpack.c.h.b16 %v222
    %v436 = vunpack.c.l.b16 %v223
    %v437 = vunpack.c.h.b16 %v223
    %v438 = vunpack.c.l.b16 %v224
    %v439 = vunpack.c.h.b16 %v224
    %v440 = vunpack.c.l.b16 %v225
    %v441 = vunpack.c.h.b16 %v225
    %v442 = vpack.c.b16 %v322, %v314
    %v443 = vpack.c.b16 %v323, %v315
    %v444 = vpack.c.b16 %v324, %v316
    %v445 = vpack.c.b16 %v325, %v317
    %v446 = vpack.c.b16 %v326, %v318
    %v447 = vpack.c.b16 %v327, %v319
    %v448 = vpack.c.b16 %v328, %v320
    %v449 = vpack.c.b16 %v329, %v321
    %v450 = vpack.c.b16 %v338, %v330
    %v451 = vpack.c.b16 %v339, %v331
    %v452 = vpack.c.b16 %v340, %v332
    %v453 = vpack.c.b16 %v341, %v333
    %v454 = vpack.c.b16 %v342, %v334
    %v455 = vpack.c.b16 %v343, %v335
    %v456 = vpack.c.b16 %v344, %v336
    %v457 = vpack.c.b16 %v345, %v337
    %v458 = vpack.c.b16 %v354, %v346
    %v459 = vpack.c.b16 %v355, %v347
    %v460 = vpack.c.b16 %v356, %v348
    %v461 = vpack.c.b16 %v357, %v349
    %v462 = vpack.c.b16 %v358, %v350
    %v463 = vpack.c.b16 %v359, %v351
    %v464 = vpack.c.b16 %v360, %v352
    %v465 = vpack.c.b16 %v361, %v353
    %v466 = vpack.c.b16 %v370, %v362
    %v467 = vpack.c.b16 %v371, %v363
    %v468 = vpack.c.b16 %v372, %v364
    %v469 = vpack.c.b16 %v373, %v365
    %v470 = vpack.c.b16 %v374, %v366
    %v471 = vpack.c.b16 %v375, %v367
    %v472 = vpack.c.b16 %v376, %v368
    %v473 = vpack.c.b16 %v377, %v369
    %v474 = vpack.c.b16 %v386, %v378
    %v475 = vpack.c.b16 %v387, %v379
    %v476 = vpack.c.b16 %v388, %v380
    %v477 = vpack.c.b16 %v389, %v381
    %v478 = vpack.c.b16 %v390, %v382
    %v479 = vpack.c.b16 %v391, %v383
    %v480 = vpack.c.b16 %v392, %v384
    %v481 = vpack.c.b16 %v393, %v385
    %v482 = vpack.c.b16 %v402, %v394
    %v483 = vpack.c.b16 %v403, %v395
    %v484 = vpack.c.b16 %v404, %v396
    %v485 = vpack.c.b16 %v405, %v397
    %v486 = vpack.c.b16 %v406, %v398
    %v487 = vpack.c.b16 %v407, %v399
    %v488 = vpack.c.b16 %v408, %v400
    %v489 = vpack.c.b16 %v409, %v401
    %v490 = vpack.c.b16 %v418, %v410
    %v491 = vpack.c.b16 %v419, %v411
    %v492 = vpack.c.b16 %v420, %v412
    %v493 = vpack.c.b16 %v421, %v413
    %v494 = vpack.c.b16 %v422, %v414
    %v495 = vpack.c.b16 %v423, %v415
    %v496 = vpack.c.b16 %v424, %v416
    %v497 = vpack.c.b16 %v425, %v417
    %v498 = vpack.c.b16 %v434, %v426
    %v499 = vpack.c.b16 %v435, %v427
    %v500 = vpack.c.b16 %v436, %v428
    %v501 = vpack.c.b16 %v437, %v429
    %v502 = vpack.c.b16 %v438, %v430
    %v503 = vpack.c.b16 %v439, %v431
    %v504 = vpack.c.b16 %v440, %v432
    %v505 = vpack.c.b16 %v441, %v433
    %570 = vmatpush.bf16.msra.mxu0 %v498
    %571 = vmatpush.bf16.msra.mxu0 %v490
    %572 = vmatpush.bf16.msra.mxu0 %v482
    %573 = vmatpush.bf16.msra.mxu0 %v474
    %574 = vmatpush.bf16.msra.mxu0 %v466
    %575 = vmatpush.bf16.msra.mxu0 %v458
    %576 = vmatpush.bf16.msra.mxu0 %v450
    %577 = vmatpush.bf16.msra.mxu0 %v442
    %578 = vmatmul.bf16.gmra.mxu0 %v248
    %v579 = vpop.f32.mrf.mxu0
    %v580 = vadd.f32 %v228, %v579
    %v581 = vpop.f32.mrf.mxu0
    %v582 = vadd.f32 %v228, %v581
    %583 = vdwg.mxu0
    %584 = vmatpush.bf16.msra.mxu0 %v499
    %585 = vmatpush.bf16.msra.mxu0 %v491
    %586 = vmatpush.bf16.msra.mxu0 %v483
    %587 = vmatpush.bf16.msra.mxu0 %v475
    %588 = vmatpush.bf16.msra.mxu0 %v467
    %589 = vmatpush.bf16.msra.mxu0 %v459
    %590 = vmatpush.bf16.msra.mxu0 %v451
    %591 = vmatpush.bf16.msra.mxu0 %v443
    %592 = vmatmul.bf16.gmra.mxu0 %v248
    %v593 = vpop.f32.mrf.mxu0
    %v594 = vadd.f32 %v229, %v593
    %v595 = vpop.f32.mrf.mxu0
    %v596 = vadd.f32 %v229, %v595
    %597 = vdwg.mxu0
    %598 = vmatpush.bf16.msra.mxu0 %v500
    %599 = vmatpush.bf16.msra.mxu0 %v492
    %600 = vmatpush.bf16.msra.mxu0 %v484
    %601 = vmatpush.bf16.msra.mxu0 %v476
    %602 = vmatpush.bf16.msra.mxu0 %v468
    %603 = vmatpush.bf16.msra.mxu0 %v460
    %604 = vmatpush.bf16.msra.mxu0 %v452
    %605 = vmatpush.bf16.msra.mxu0 %v444
    %606 = vmatmul.bf16.gmra.mxu0 %v248
    %v607 = vpop.f32.mrf.mxu0
    %v608 = vadd.f32 %v230, %v607
    %v609 = vpop.f32.mrf.mxu0
    %v610 = vadd.f32 %v230, %v609
    %611 = vdwg.mxu0
    %612 = vmatpush.bf16.msra.mxu0 %v501
    %613 = vmatpush.bf16.msra.mxu0 %v493
    %614 = vmatpush.bf16.msra.mxu0 %v485
    %615 = vmatpush.bf16.msra.mxu0 %v477
    %616 = vmatpush.bf16.msra.mxu0 %v469
    %617 = vmatpush.bf16.msra.mxu0 %v461
    %618 = vmatpush.bf16.msra.mxu0 %v453
    %619 = vmatpush.bf16.msra.mxu0 %v445
    %620 = vmatmul.bf16.gmra.mxu0 %v248
    %v621 = vpop.f32.mrf.mxu0
    %v622 = vadd.f32 %v231, %v621
    %v623 = vpop.f32.mrf.mxu0
    %v624 = vadd.f32 %v231, %v623
    %625 = vdwg.mxu0
    %626 = vmatpush.bf16.msra.mxu0 %v502
    %627 = vmatpush.bf16.msra.mxu0 %v494
    %628 = vmatpush.bf16.msra.mxu0 %v486
    %629 = vmatpush.bf16.msra.mxu0 %v478
    %630 = vmatpush.bf16.msra.mxu0 %v470
    %631 = vmatpush.bf16.msra.mxu0 %v462
    %632 = vmatpush.bf16.msra.mxu0 %v454
    %633 = vmatpush.bf16.msra.mxu0 %v446
    %634 = vmatmul.bf16.gmra.mxu0 %v248
    %v635 = vpop.f32.mrf.mxu0
    %v636 = vadd.f32 %v232, %v635
    %v637 = vpop.f32.mrf.mxu0
    %v638 = vadd.f32 %v232, %v637
    %639 = vdwg.mxu0
    %640 = vmatpush.bf16.msra.mxu0 %v503
    %641 = vmatpush.bf16.msra.mxu0 %v495
    %642 = vmatpush.bf16.msra.mxu0 %v487
    %643 = vmatpush.bf16.msra.mxu0 %v479
    %644 = vmatpush.bf16.msra.mxu0 %v471
    %645 = vmatpush.bf16.msra.mxu0 %v463
    %646 = vmatpush.bf16.msra.mxu0 %v455
    %647 = vmatpush.bf16.msra.mxu0 %v447
    %648 = vmatmul.bf16.gmra.mxu0 %v248
    %v649 = vpop.f32.mrf.mxu0
    %v650 = vadd.f32 %v233, %v649
    %v651 = vpop.f32.mrf.mxu0
    %v652 = vadd.f32 %v233, %v651
    %653 = vdwg.mxu0
    %654 = vmatpush.bf16.msra.mxu0 %v504
    %655 = vmatpush.bf16.msra.mxu0 %v496
    %656 = vmatpush.bf16.msra.mxu0 %v488
    %657 = vmatpush.bf16.msra.mxu0 %v480
    %658 = vmatpush.bf16.msra.mxu0 %v472
    %659 = vmatpush.bf16.msra.mxu0 %v464
    %660 = vmatpush.bf16.msra.mxu0 %v456
    %661 = vmatpush.bf16.msra.mxu0 %v448
    %662 = vmatmul.bf16.gmra.mxu0 %v248
    %v663 = vpop.f32.mrf.mxu0
    %v664 = vadd.f32 %v234, %v663
    %v665 = vpop.f32.mrf.mxu0
    %v666 = vadd.f32 %v234, %v665
    %667 = vdwg.mxu0
    %668 = vmatpush.bf16.msra.mxu0 %v505
    %669 = vmatpush.bf16.msra.mxu0 %v497
    %670 = vmatpush.bf16.msra.mxu0 %v489
    %671 = vmatpush.bf16.msra.mxu0 %v481
    %672 = vmatpush.bf16.msra.mxu0 %v473
    %673 = vmatpush.bf16.msra.mxu0 %v465
    %674 = vmatpush.bf16.msra.mxu0 %v457
    %675 = vmatpush.bf16.msra.mxu0 %v449
    %676 = vmatmul.bf16.gmra.mxu0 %v248
    %v677 = vpop.f32.mrf.mxu0
    %v678 = vadd.f32 %v235, %v677
    %v679 = vpop.f32.mrf.mxu0
    %v680 = vadd.f32 %v235, %v679
    %681 = vdwg.mxu0
    %v682 = vmax.f32 %v580, 0.0
    %v683 = vmax.f32 %v594, 0.0
    %v684 = vmax.f32 %v608, 0.0
    %v685 = vmax.f32 %v622, 0.0
    %v686 = vmax.f32 %v636, 0.0
    %v687 = vmax.f32 %v650, 0.0
    %v688 = vmax.f32 %v664, 0.0
    %v689 = vmax.f32 %v678, 0.0
    %v690 = vmax.f32 %v582, 0.0
    %v691 = vmax.f32 %v596, 0.0
    %v692 = vmax.f32 %v610, 0.0
    %v693 = vmax.f32 %v624, 0.0
    %v694 = vmax.f32 %v638, 0.0
    %v695 = vmax.f32 %v652, 0.0
    %v696 = vmax.f32 %v666, 0.0
    %v697 = vmax.f32 %v680, 0.0
    %v698 = vpack.c.bf16 %v683, %v682
    %v699 = vpack.c.bf16 %v685, %v684
    %v700 = vpack.c.bf16 %v687, %v686
    %v701 = vpack.c.bf16 %v689, %v688
    %v702 = vpack.c.bf16 %v691, %v690
    %v703 = vpack.c.bf16 %v693, %v692
    %v704 = vpack.c.bf16 %v695, %v694
    %v705 = vpack.c.bf16 %v697, %v696
    %v706 = vld [vmem:[#allocation8] sm:$0xff]
    %v707 = vld [vmem:[#allocation8 + $0x8] sm:$0xf]
    %v708 = vld [vmem:[#allocation8 + $0xc] sm:$0xff]
    %v709 = vld [vmem:[#allocation8 + $0x14] sm:$0xf]
    %v710 = vld [vmem:[#allocation8 + $0x18] sm:$0xff]
    %v711 = vld [vmem:[#allocation8 + $0x20] sm:$0xf]
    %v712 = vld [vmem:[#allocation8 + $0x24] sm:$0xff]
    %v713 = vld [vmem:[#allocation8 + $0x2c] sm:$0xf]
    %v714 = vld [vmem:[#allocation8 + $0x30] sm:$0xff]
    %v715 = vld [vmem:[#allocation8 + $0x38] sm:$0xf]
    %v716 = vld [vmem:[#allocation8 + $0x3c] sm:$0xff]
    %v717 = vld [vmem:[#allocation8 + $0x44] sm:$0xf]
    %v718 = vld [vmem:[#allocation8 + $0x48] sm:$0xff]
    %v719 = vld [vmem:[#allocation8 + $0x50] sm:$0xf]
    %v720 = vld [vmem:[#allocation8 + $0x54] sm:$0xff]
    %v721 = vld [vmem:[#allocation8 + $0x5c] sm:$0xf]
    %v722 = vld [vmem:[#allocation8 + $0x60] sm:$0xff]
    %v723 = vld [vmem:[#allocation8 + $0x68] sm:$0xf]
    %v724 = vld [vmem:[#allocation8 + $0x6c] sm:$0xff]
    %v725 = vld [vmem:[#allocation8 + $0x74] sm:$0xf]
    %v726 = vld [vmem:[#allocation8 + $0x78] sm:$0xff]
    %v727 = vld [vmem:[#allocation8 + $0x80] sm:$0xf]
    %v728 = vld [vmem:[#allocation8 + $0x84] sm:$0xff]
    %v729 = vld [vmem:[#allocation8 + $0x8c] sm:$0xf]
    %v730 = vld [vmem:[#allocation8 + $0x90] sm:$0xff]
    %v731 = vld [vmem:[#allocation8 + $0x98] sm:$0xf]
    %v732 = vld [vmem:[#allocation8 + $0x9c] sm:$0xff]
    %v733 = vld [vmem:[#allocation8 + $0xa4] sm:$0xf]
    %v734 = vld [vmem:[#allocation8 + $0xa8] sm:$0xff]
    %v735 = vld [vmem:[#allocation8 + $0xb0] sm:$0xf]
    %v736 = vld [vmem:[#allocation8 + $0xb4] sm:$0xff]
    %v737 = vld [vmem:[#allocation8 + $0xbc] sm:$0xf]
    %v738 = vld [vmem:[#allocation8 + $0xc0] sm:$0xff]
    %v739 = vld [vmem:[#allocation8 + $0xc8] sm:$0xf]
    %v740 = vld [vmem:[#allocation8 + $0xcc] sm:$0xff]
    %v741 = vld [vmem:[#allocation8 + $0xd4] sm:$0xf]
    %v742 = vld [vmem:[#allocation8 + $0xd8] sm:$0xff]
    %v743 = vld [vmem:[#allocation8 + $0xe0] sm:$0xf]
    %v744 = vld [vmem:[#allocation8 + $0xe4] sm:$0xff]
    %v745 = vld [vmem:[#allocation8 + $0xec] sm:$0xf]
    %v746 = vld [vmem:[#allocation8 + $0xf0] sm:$0xff]
    %v747 = vld [vmem:[#allocation8 + $0xf8] sm:$0xf]
    %v748 = vld [vmem:[#allocation8 + $0xfc] sm:$0xff]
    %v749 = vld [vmem:[#allocation8 + $0x104] sm:$0xf]
    %v750 = vld [vmem:[#allocation8 + $0x108] sm:$0xff]
    %v751 = vld [vmem:[#allocation8 + $0x110] sm:$0xf]
    %v752 = vld [vmem:[#allocation8 + $0x114] sm:$0xff]
    %v753 = vld [vmem:[#allocation8 + $0x11c] sm:$0xf]
    %v754 = vld [vmem:[#allocation8 + $0x120] sm:$0xff]
    %v755 = vld [vmem:[#allocation8 + $0x128] sm:$0xf]
    %v756 = vld [vmem:[#allocation8 + $0x12c] sm:$0xff]
    %v757 = vld [vmem:[#allocation8 + $0x134] sm:$0xf]
    %v758 = vld [vmem:[#allocation8 + $0x138] sm:$0xff]
    %v759 = vld [vmem:[#allocation8 + $0x140] sm:$0xf]
    %v760 = vld [vmem:[#allocation8 + $0x144] sm:$0xff]
    %v761 = vld [vmem:[#allocation8 + $0x14c] sm:$0xf]
    %v762 = vld [vmem:[#allocation8 + $0x150] sm:$0xff]
    %v763 = vld [vmem:[#allocation8 + $0x158] sm:$0xf]
    %v764 = vld [vmem:[#allocation8 + $0x15c] sm:$0xff]
    %v765 = vld [vmem:[#allocation8 + $0x164] sm:$0xf]
    %v766 = vld [vmem:[#allocation8 + $0x168] sm:$0xff]
    %v767 = vld [vmem:[#allocation8 + $0x170] sm:$0xf]
    %v768 = vld [vmem:[#allocation8 + $0x174] sm:$0xff]
    %v769 = vld [vmem:[#allocation8 + $0x17c] sm:$0xf]
    %v770 = vld [vmem:[#allocation8 + $0x180] sm:$0xff]
    %v771 = vld [vmem:[#allocation8 + $0x188] sm:$0xf]
    %v772 = vld [vmem:[#allocation8 + $0x18c] sm:$0xff]
    %v773 = vld [vmem:[#allocation8 + $0x194] sm:$0xf]
    %v774 = vld [vmem:[#allocation8 + $0x198] sm:$0xff]
    %v775 = vld [vmem:[#allocation8 + $0x1a0] sm:$0xf]
    %v776 = vld [vmem:[#allocation8 + $0x1a4] sm:$0xff]
    %v777 = vld [vmem:[#allocation8 + $0x1ac] sm:$0xf]
    %v778 = vld [vmem:[#allocation8 + $0x1b0] sm:$0xff]
    %v779 = vld [vmem:[#allocation8 + $0x1b8] sm:$0xf]
    %v780 = vld [vmem:[#allocation8 + $0x1bc] sm:$0xff]
    %v781 = vld [vmem:[#allocation8 + $0x1c4] sm:$0xf]
    %v782 = vld [vmem:[#allocation8 + $0x1c8] sm:$0xff]
    %v783 = vld [vmem:[#allocation8 + $0x1d0] sm:$0xf]
    %v784 = vld [vmem:[#allocation8 + $0x1d4] sm:$0xff]
    %v785 = vld [vmem:[#allocation8 + $0x1dc] sm:$0xf]
    %v786 = vld [vmem:[#allocation8 + $0x1e0] sm:$0xff]
    %v787 = vld [vmem:[#allocation8 + $0x1e8] sm:$0xf]
    %v788 = vld [vmem:[#allocation8 + $0x1ec] sm:$0xff]
    %v789 = vld [vmem:[#allocation8 + $0x1f4] sm:$0xf]
    %v790 = vld [vmem:[#allocation8 + $0x1f8] sm:$0xff]
    %v791 = vld [vmem:[#allocation8 + $0x200] sm:$0xf]
    %v792 = vld [vmem:[#allocation8 + $0x204] sm:$0xff]
    %v793 = vld [vmem:[#allocation8 + $0x20c] sm:$0xf]
    %v794 = vld [vmem:[#allocation8 + $0x210] sm:$0xff]
    %v795 = vld [vmem:[#allocation8 + $0x218] sm:$0xf]
    %v796 = vld [vmem:[#allocation8 + $0x21c] sm:$0xff]
    %v797 = vld [vmem:[#allocation8 + $0x224] sm:$0xf]
    %v798 = vld [vmem:[#allocation8 + $0x228] sm:$0xff]
    %v799 = vld [vmem:[#allocation8 + $0x230] sm:$0xf]
    %v800 = vld [vmem:[#allocation8 + $0x234] sm:$0xff]
    %v801 = vld [vmem:[#allocation8 + $0x23c] sm:$0xf]
    %v802 = vld [vmem:[#allocation8 + $0x240] sm:$0xff]
    %v803 = vld [vmem:[#allocation8 + $0x248] sm:$0xf]
    %v804 = vld [vmem:[#allocation8 + $0x24c] sm:$0xff]
    %v805 = vld [vmem:[#allocation8 + $0x254] sm:$0xf]
    %v806 = vld [vmem:[#allocation8 + $0x258] sm:$0xff]
    %v807 = vld [vmem:[#allocation8 + $0x260] sm:$0xf]
    %v808 = vld [vmem:[#allocation8 + $0x264] sm:$0xff]
    %v809 = vld [vmem:[#allocation8 + $0x26c] sm:$0xf]
    %v810 = vld [vmem:[#allocation8 + $0x270] sm:$0xff]
    %v811 = vld [vmem:[#allocation8 + $0x278] sm:$0xf]
    %v812 = vld [vmem:[#allocation8 + $0x27c] sm:$0xff]
    %v813 = vld [vmem:[#allocation8 + $0x284] sm:$0xf]
    %v814 = vld [vmem:[#allocation8 + $0x288] sm:$0xff]
    %v815 = vld [vmem:[#allocation8 + $0x290] sm:$0xf]
    %v816 = vld [vmem:[#allocation8 + $0x294] sm:$0xff]
    %v817 = vld [vmem:[#allocation8 + $0x29c] sm:$0xf]
    %v818 = vld [vmem:[#allocation8 + $0x2a0] sm:$0xff]
    %v819 = vld [vmem:[#allocation8 + $0x2a8] sm:$0xf]
    %v820 = vld [vmem:[#allocation8 + $0x2ac] sm:$0xff]
    %v821 = vld [vmem:[#allocation8 + $0x2b4] sm:$0xf]
    %v822 = vld [vmem:[#allocation8 + $0x2b8] sm:$0xff]
    %v823 = vld [vmem:[#allocation8 + $0x2c0] sm:$0xf]
    %v824 = vld [vmem:[#allocation8 + $0x2c4] sm:$0xff]
    %v825 = vld [vmem:[#allocation8 + $0x2cc] sm:$0xf]
    %v826 = vld [vmem:[#allocation8 + $0x2d0] sm:$0xff]
    %v827 = vld [vmem:[#allocation8 + $0x2d8] sm:$0xf]
    %v828 = vld [vmem:[#allocation8 + $0x2dc] sm:$0xff]
    %v829 = vld [vmem:[#allocation8 + $0x2e4] sm:$0xf]
    %v830 = vld [vmem:[#allocation8 + $0x2e8] sm:$0xff]
    %v831 = vld [vmem:[#allocation8 + $0x2f0] sm:$0xf]
    %v832 = vld [vmem:[#allocation8 + $0x2f4] sm:$0xff]
    %v833 = vld [vmem:[#allocation8 + $0x2fc] sm:$0xf]
    %v834 = vld [vmem:[%s4] sm:$0x7]
    %v836 = vperm.slane %v834, 0
    %v837 = vperm.slane %v834, 1
    %v838 = vperm.slane %v834, 2
    %v846 = vunpack.c.l.b16 %v698
    %v847 = vunpack.c.h.b16 %v698
    %v848 = vunpack.c.l.b16 %v699
    %v849 = vunpack.c.h.b16 %v699
    %v850 = vunpack.c.l.b16 %v702
    %v851 = vunpack.c.h.b16 %v702
    %v852 = vunpack.c.l.b16 %v703
    %v853 = vunpack.c.h.b16 %v703
    %v854 = vpack.c.b16 %v850, %v846
    %v855 = vpack.c.b16 %v851, %v847
    %v856 = vpack.c.b16 %v852, %v848
    %v857 = vpack.c.b16 %v853, %v849
    %v990 = vunpack.c.l.b16 %v706
    %v991 = vunpack.c.h.b16 %v706
    %v992 = vunpack.c.l.b16 %v707
    %v993 = vunpack.c.l.b16 %v708
    %v994 = vunpack.c.h.b16 %v708
    %v995 = vunpack.c.l.b16 %v709
    %v996 = vunpack.c.l.b16 %v710
    %v997 = vunpack.c.h.b16 %v710
    %v998 = vunpack.c.l.b16 %v711
    %v999 = vunpack.c.l.b16 %v712
    %v1000 = vunpack.c.h.b16 %v712
    %v1001 = vunpack.c.l.b16 %v713
    %v1002 = vunpack.c.l.b16 %v714
    %v1003 = vunpack.c.h.b16 %v714
    %v1004 = vunpack.c.l.b16 %v715
    %v1005 = vunpack.c.l.b16 %v716
    %v1006 = vunpack.c.h.b16 %v716
    %v1007 = vunpack.c.l.b16 %v717
    %v1008 = vunpack.c.l.b16 %v718
    %v1009 = vunpack.c.h.b16 %v718
    %v1010 = vunpack.c.l.b16 %v719
    %v1011 = vunpack.c.l.b16 %v720
    %v1012 = vunpack.c.h.b16 %v720
    %v1013 = vunpack.c.l.b16 %v721
    %v1014 = vunpack.c.l.b16 %v722
    %v1015 = vunpack.c.h.b16 %v722
    %v1016 = vunpack.c.l.b16 %v723
    %v1017 = vunpack.c.l.b16 %v724
    %v1018 = vunpack.c.h.b16 %v724
    %v1019 = vunpack.c.l.b16 %v725
    %v1020 = vunpack.c.l.b16 %v726
    %v1021 = vunpack.c.h.b16 %v726
    %v1022 = vunpack.c.l.b16 %v727
    %v1023 = vunpack.c.l.b16 %v728
    %v1024 = vunpack.c.h.b16 %v728
    %v1025 = vunpack.c.l.b16 %v729
    %v1026 = vunpack.c.l.b16 %v730
    %v1027 = vunpack.c.h.b16 %v730
    %v1028 = vunpack.c.l.b16 %v731
    %v1029 = vunpack.c.l.b16 %v732
    %v1030 = vunpack.c.h.b16 %v732
    %v1031 = vunpack.c.l.b16 %v733
    %v1032 = vunpack.c.l.b16 %v734
    %v1033 = vunpack.c.h.b16 %v734
    %v1034 = vunpack.c.l.b16 %v735
    %v1035 = vunpack.c.l.b16 %v736
    %v1036 = vunpack.c.h.b16 %v736
    %v1037 = vunpack.c.l.b16 %v737
    %v1038 = vunpack.c.l.b16 %v738
    %v1039 = vunpack.c.h.b16 %v738
    %v1040 = vunpack.c.l.b16 %v739
    %v1041 = vunpack.c.l.b16 %v740
    %v1042 = vunpack.c.h.b16 %v740
    %v1043 = vunpack.c.l.b16 %v741
    %v1044 = vunpack.c.l.b16 %v742
    %v1045 = vunpack.c.h.b16 %v742
    %v1046 = vunpack.c.l.b16 %v743
    %v1047 = vunpack.c.l.b16 %v744
    %v1048 = vunpack.c.h.b16 %v744
    %v1049 = vunpack.c.l.b16 %v745
    %v1050 = vunpack.c.l.b16 %v746
    %v1051 = vunpack.c.h.b16 %v746
    %v1052 = vunpack.c.l.b16 %v747
    %v1053 = vunpack.c.l.b16 %v748
    %v1054 = vunpack.c.h.b16 %v748
    %v1055 = vunpack.c.l.b16 %v749
    %v1056 = vunpack.c.l.b16 %v750
    %v1057 = vunpack.c.h.b16 %v750
    %v1058 = vunpack.c.l.b16 %v751
    %v1059 = vunpack.c.l.b16 %v752
    %v1060 = vunpack.c.h.b16 %v752
    %v1061 = vunpack.c.l.b16 %v753
    %v1062 = vunpack.c.l.b16 %v754
    %v1063 = vunpack.c.h.b16 %v754
    %v1064 = vunpack.c.l.b16 %v755
    %v1065 = vunpack.c.l.b16 %v756
    %v1066 = vunpack.c.h.b16 %v756
    %v1067 = vunpack.c.l.b16 %v757
    %v1068 = vunpack.c.l.b16 %v758
    %v1069 = vunpack.c.h.b16 %v758
    %v1070 = vunpack.c.l.b16 %v759
    %v1071 = vunpack.c.l.b16 %v760
    %v1072 = vunpack.c.h.b16 %v760
    %v1073 = vunpack.c.l.b16 %v761
    %v1074 = vunpack.c.l.b16 %v762
    %v1075 = vunpack.c.h.b16 %v762
    %v1076 = vunpack.c.l.b16 %v763
    %v1077 = vunpack.c.l.b16 %v764
    %v1078 = vunpack.c.h.b16 %v764
    %v1079 = vunpack.c.l.b16 %v765
    %v1080 = vunpack.c.l.b16 %v766
    %v1081 = vunpack.c.h.b16 %v766
    %v1082 = vunpack.c.l.b16 %v767
    %v1083 = vunpack.c.l.b16 %v768
    %v1084 = vunpack.c.h.b16 %v768
    %v1085 = vunpack.c.l.b16 %v769
    %v1086 = vunpack.c.l.b16 %v770
    %v1087 = vunpack.c.h.b16 %v770
    %v1088 = vunpack.c.l.b16 %v771
    %v1089 = vunpack.c.l.b16 %v772
    %v1090 = vunpack.c.h.b16 %v772
    %v1091 = vunpack.c.l.b16 %v773
    %v1092 = vunpack.c.l.b16 %v774
    %v1093 = vunpack.c.h.b16 %v774
    %v1094 = vunpack.c.l.b16 %v775
    %v1095 = vunpack.c.l.b16 %v776
    %v1096 = vunpack.c.h.b16 %v776
    %v1097 = vunpack.c.l.b16 %v777
    %v1098 = vunpack.c.l.b16 %v778
    %v1099 = vunpack.c.h.b16 %v778
    %v1100 = vunpack.c.l.b16 %v779
    %v1101 = vunpack.c.l.b16 %v780
    %v1102 = vunpack.c.h.b16 %v780
    %v1103 = vunpack.c.l.b16 %v781
    %v1104 = vunpack.c.l.b16 %v782
    %v1105 = vunpack.c.h.b16 %v782
    %v1106 = vunpack.c.l.b16 %v783
    %v1107 = vunpack.c.l.b16 %v784
    %v1108 = vunpack.c.h.b16 %v784
    %v1109 = vunpack.c.l.b16 %v785
    %v1110 = vunpack.c.l.b16 %v786
    %v1111 = vunpack.c.h.b16 %v786
    %v1112 = vunpack.c.l.b16 %v787
    %v1113 = vunpack.c.l.b16 %v788
    %v1114 = vunpack.c.h.b16 %v788
    %v1115 = vunpack.c.l.b16 %v789
    %v1116 = vunpack.c.l.b16 %v790
    %v1117 = vunpack.c.h.b16 %v790
    %v1118 = vunpack.c.l.b16 %v791
    %v1119 = vunpack.c.l.b16 %v792
    %v1120 = vunpack.c.h.b16 %v792
    %v1121 = vunpack.c.l.b16 %v793
    %v1122 = vunpack.c.l.b16 %v794
    %v1123 = vunpack.c.h.b16 %v794
    %v1124 = vunpack.c.l.b16 %v795
    %v1125 = vunpack.c.l.b16 %v796
    %v1126 = vunpack.c.h.b16 %v796
    %v1127 = vunpack.c.l.b16 %v797
    %v1128 = vunpack.c.l.b16 %v798
    %v1129 = vunpack.c.h.b16 %v798
    %v1130 = vunpack.c.l.b16 %v799
    %v1131 = vunpack.c.l.b16 %v800
    %v1132 = vunpack.c.h.b16 %v800
    %v1133 = vunpack.c.l.b16 %v801
    %v1134 = vunpack.c.l.b16 %v802
    %v1135 = vunpack.c.h.b16 %v802
    %v1136 = vunpack.c.l.b16 %v803
    %v1137 = vunpack.c.l.b16 %v804
    %v1138 = vunpack.c.h.b16 %v804
    %v1139 = vunpack.c.l.b16 %v805
    %v1140 = vunpack.c.l.b16 %v806
    %v1141 = vunpack.c.h.b16 %v806
    %v1142 = vunpack.c.l.b16 %v807
    %v1143 = vunpack.c.l.b16 %v808
    %v1144 = vunpack.c.h.b16 %v808
    %v1145 = vunpack.c.l.b16 %v809
    %v1146 = vunpack.c.l.b16 %v810
    %v1147 = vunpack.c.h.b16 %v810
    %v1148 = vunpack.c.l.b16 %v811
    %v1149 = vunpack.c.l.b16 %v812
    %v1150 = vunpack.c.h.b16 %v812
    %v1151 = vunpack.c.l.b16 %v813
    %v1152 = vunpack.c.l.b16 %v814
    %v1153 = vunpack.c.h.b16 %v814
    %v1154 = vunpack.c.l.b16 %v815
    %v1155 = vunpack.c.l.b16 %v816
    %v1156 = vunpack.c.h.b16 %v816
    %v1157 = vunpack.c.l.b16 %v817
    %v1158 = vunpack.c.l.b16 %v818
    %v1159 = vunpack.c.h.b16 %v818
    %v1160 = vunpack.c.l.b16 %v819
    %v1161 = vunpack.c.l.b16 %v820
    %v1162 = vunpack.c.h.b16 %v820
    %v1163 = vunpack.c.l.b16 %v821
    %v1164 = vunpack.c.l.b16 %v822
    %v1165 = vunpack.c.h.b16 %v822
    %v1166 = vunpack.c.l.b16 %v823
    %v1167 = vunpack.c.l.b16 %v824
    %v1168 = vunpack.c.h.b16 %v824
    %v1169 = vunpack.c.l.b16 %v825
    %v1170 = vunpack.c.l.b16 %v826
    %v1171 = vunpack.c.h.b16 %v826
    %v1172 = vunpack.c.l.b16 %v827
    %v1173 = vunpack.c.l.b16 %v828
    %v1174 = vunpack.c.h.b16 %v828
    %v1175 = vunpack.c.l.b16 %v829
    %v1176 = vunpack.c.l.b16 %v830
    %v1177 = vunpack.c.h.b16 %v830
    %v1178 = vunpack.c.l.b16 %v831
    %v1179 = vunpack.c.l.b16 %v832
    %v1180 = vunpack.c.h.b16 %v832
    %v1181 = vunpack.c.l.b16 %v833
    %v1182 = vpack.c.b16 %v993, %v990
    %v1183 = vpack.c.b16 %v994, %v991
    %v1184 = vpack.c.b16 %v995, %v992
    %v1185 = vpack.c.b16 %v999, %v996
    %v1186 = vpack.c.b16 %v1000, %v997
    %v1187 = vpack.c.b16 %v1001, %v998
    %v1188 = vpack.c.b16 %v1005, %v1002
    %v1189 = vpack.c.b16 %v1006, %v1003
    %v1190 = vpack.c.b16 %v1007, %v1004
    %v1191 = vpack.c.b16 %v1011, %v1008
    %v1192 = vpack.c.b16 %v1012, %v1009
    %v1193 = vpack.c.b16 %v1013, %v1010
    %v1194 = vpack.c.b16 %v1017, %v1014
    %v1195 = vpack.c.b16 %v1018, %v1015
    %v1196 = vpack.c.b16 %v1019, %v1016
    %v1197 = vpack.c.b16 %v1023, %v1020
    %v1198 = vpack.c.b16 %v1024, %v1021
    %v1199 = vpack.c.b16 %v1025, %v1022
    %v1200 = vpack.c.b16 %v1029, %v1026
    %v1201 = vpack.c.b16 %v1030, %v1027
    %v1202 = vpack.c.b16 %v1031, %v1028
    %v1203 = vpack.c.b16 %v1035, %v1032
    %v1204 = vpack.c.b16 %v1036, %v1033
    %v1205 = vpack.c.b16 %v1037, %v1034
    %v1206 = vpack.c.b16 %v1041, %v1038
    %v1207 = vpack.c.b16 %v1042, %v1039
    %v1208 = vpack.c.b16 %v1043, %v1040
    %v1209 = vpack.c.b16 %v1047, %v1044
    %v1210 = vpack.c.b16 %v1048, %v1045
    %v1211 = vpack.c.b16 %v1049, %v1046
    %v1212 = vpack.c.b16 %v1053, %v1050
    %v1213 = vpack.c.b16 %v1054, %v1051
    %v1214 = vpack.c.b16 %v1055, %v1052
    %v1215 = vpack.c.b16 %v1059, %v1056
    %v1216 = vpack.c.b16 %v1060, %v1057
    %v1217 = vpack.c.b16 %v1061, %v1058
    %v1218 = vpack.c.b16 %v1065, %v1062
    %v1219 = vpack.c.b16 %v1066, %v1063
    %v1220 = vpack.c.b16 %v1067, %v1064
    %v1221 = vpack.c.b16 %v1071, %v1068
    %v1222 = vpack.c.b16 %v1072, %v1069
    %v1223 = vpack.c.b16 %v1073, %v1070
    %v1224 = vpack.c.b16 %v1077, %v1074
    %v1225 = vpack.c.b16 %v1078, %v1075
    %v1226 = vpack.c.b16 %v1079, %v1076
    %v1227 = vpack.c.b16 %v1083, %v1080
    %v1228 = vpack.c.b16 %v1084, %v1081
    %v1229 = vpack.c.b16 %v1085, %v1082
    %v1230 = vpack.c.b16 %v1089, %v1086
    %v1231 = vpack.c.b16 %v1090, %v1087
    %v1232 = vpack.c.b16 %v1091, %v1088
    %v1233 = vpack.c.b16 %v1095, %v1092
    %v1234 = vpack.c.b16 %v1096, %v1093
    %v1235 = vpack.c.b16 %v1097, %v1094
    %v1236 = vpack.c.b16 %v1101, %v1098
    %v1237 = vpack.c.b16 %v1102, %v1099
    %v1238 = vpack.c.b16 %v1103, %v1100
    %v1239 = vpack.c.b16 %v1107, %v1104
    %v1240 = vpack.c.b16 %v1108, %v1105
    %v1241 = vpack.c.b16 %v1109, %v1106
    %v1242 = vpack.c.b16 %v1113, %v1110
    %v1243 = vpack.c.b16 %v1114, %v1111
    %v1244 = vpack.c.b16 %v1115, %v1112
    %v1245 = vpack.c.b16 %v1119, %v1116
    %v1246 = vpack.c.b16 %v1120, %v1117
    %v1247 = vpack.c.b16 %v1121, %v1118
    %v1248 = vpack.c.b16 %v1125, %v1122
    %v1249 = vpack.c.b16 %v1126, %v1123
    %v1250 = vpack.c.b16 %v1127, %v1124
    %v1251 = vpack.c.b16 %v1131, %v1128
    %v1252 = vpack.c.b16 %v1132, %v1129
    %v1253 = vpack.c.b16 %v1133, %v1130
    %v1254 = vpack.c.b16 %v1137, %v1134
    %v1255 = vpack.c.b16 %v1138, %v1135
    %v1256 = vpack.c.b16 %v1139, %v1136
    %v1257 = vpack.c.b16 %v1143, %v1140
    %v1258 = vpack.c.b16 %v1144, %v1141
    %v1259 = vpack.c.b16 %v1145, %v1142
    %v1260 = vpack.c.b16 %v1149, %v1146
    %v1261 = vpack.c.b16 %v1150, %v1147
    %v1262 = vpack.c.b16 %v1151, %v1148
    %v1263 = vpack.c.b16 %v1155, %v1152
    %v1264 = vpack.c.b16 %v1156, %v1153
    %v1265 = vpack.c.b16 %v1157, %v1154
    %v1266 = vpack.c.b16 %v1161, %v1158
    %v1267 = vpack.c.b16 %v1162, %v1159
    %v1268 = vpack.c.b16 %v1163, %v1160
    %v1269 = vpack.c.b16 %v1167, %v1164
    %v1270 = vpack.c.b16 %v1168, %v1165
    %v1271 = vpack.c.b16 %v1169, %v1166
    %v1272 = vpack.c.b16 %v1173, %v1170
    %v1273 = vpack.c.b16 %v1174, %v1171
    %v1274 = vpack.c.b16 %v1175, %v1172
    %v1275 = vpack.c.b16 %v1179, %v1176
    %v1276 = vpack.c.b16 %v1180, %v1177
    %v1277 = vpack.c.b16 %v1181, %v1178
    %1374 = vmatpush.bf16.msra.mxu0 %v1203
    %1375 = vmatpush.bf16.msra.mxu0 %v1200
    %1376 = vmatpush.bf16.msra.mxu0 %v1197
    %1377 = vmatpush.bf16.msra.mxu0 %v1194
    %1378 = vmatpush.bf16.msra.mxu0 %v1191
    %1379 = vmatpush.bf16.msra.mxu0 %v1188
    %1380 = vmatpush.bf16.msra.mxu0 %v1185
    %1381 = vmatpush.bf16.msra.mxu0 %v1182
    %1382 = vmatmul.bf16.gmra.mxu0 %v854
    %v1383 = vpop.f32.mrf.mxu0
    %v1384 = vadd.f32 %v836, %v1383
    %v1385 = vpop.f32.mrf.mxu0
    %v1386 = vadd.f32 %v836, %v1385
    %1387 = vdwg.mxu0
    %1388 = vmatpush.bf16.msra.mxu0 %v1227
    %1389 = vmatpush.bf16.msra.mxu0 %v1224
    %1390 = vmatpush.bf16.msra.mxu0 %v1221
    %1391 = vmatpush.bf16.msra.mxu0 %v1218
    %1392 = vmatpush.bf16.msra.mxu0 %v1215
    %1393 = vmatpush.bf16.msra.mxu0 %v1212
    %1394 = vmatpush.bf16.msra.mxu0 %v1209
    %1395 = vmatpush.bf16.msra.mxu0 %v1206
    %1396 = vmatmul.bf16.gmra.mxu0 %v855
    %v1397 = vpop.f32.mrf.mxu0
    %v1398 = vadd.f32 %v1384, %v1397
    %v1399 = vpop.f32.mrf.mxu0
    %v1400 = vadd.f32 %v1386, %v1399
    %1401 = vdwg.mxu0
    %1402 = vmatpush.bf16.msra.mxu0 %v1251
    %1403 = vmatpush.bf16.msra.mxu0 %v1248
    %1404 = vmatpush.bf16.msra.mxu0 %v1245
    %1405 = vmatpush.bf16.msra.mxu0 %v1242
    %1406 = vmatpush.bf16.msra.mxu0 %v1239
    %1407 = vmatpush.bf16.msra.mxu0 %v1236
    %1408 = vmatpush.bf16.msra.mxu0 %v1233
    %1409 = vmatpush.bf16.msra.mxu0 %v1230
    %1410 = vmatmul.bf16.gmra.mxu0 %v856
    %v1411 = vpop.f32.mrf.mxu0
    %v1412 = vadd.f32 %v1398, %v1411
    %v1413 = vpop.f32.mrf.mxu0
    %v1414 = vadd.f32 %v1400, %v1413
    %1415 = vdwg.mxu0
    %1416 = vmatpush.bf16.msra.mxu0 %v1275
    %1417 = vmatpush.bf16.msra.mxu0 %v1272
    %1418 = vmatpush.bf16.msra.mxu0 %v1269
    %1419 = vmatpush.bf16.msra.mxu0 %v1266
    %1420 = vmatpush.bf16.msra.mxu0 %v1263
    %1421 = vmatpush.bf16.msra.mxu0 %v1260
    %1422 = vmatpush.bf16.msra.mxu0 %v1257
    %1423 = vmatpush.bf16.msra.mxu0 %v1254
    %1424 = vmatmul.bf16.gmra.mxu0 %v857
    %v1425 = vpop.f32.mrf.mxu0
    %v1426 = vadd.f32 %v1412, %v1425
    %v1427 = vpop.f32.mrf.mxu0
    %v1428 = vadd.f32 %v1414, %v1427
    %1429 = vdwg.mxu0
    %1430 = vmatpush.bf16.msra.mxu0 %v1204
    %1431 = vmatpush.bf16.msra.mxu0 %v1201
    %1432 = vmatpush.bf16.msra.mxu0 %v1198
    %1433 = vmatpush.bf16.msra.mxu0 %v1195
    %1434 = vmatpush.bf16.msra.mxu0 %v1192
    %1435 = vmatpush.bf16.msra.mxu0 %v1189
    %1436 = vmatpush.bf16.msra.mxu0 %v1186
    %1437 = vmatpush.bf16.msra.mxu0 %v1183
    %1438 = vmatmul.bf16.gmra.mxu0 %v854
    %v1439 = vpop.f32.mrf.mxu0
    %v1440 = vadd.f32 %v837, %v1439
    %v1441 = vpop.f32.mrf.mxu0
    %v1442 = vadd.f32 %v837, %v1441
    %1443 = vdwg.mxu0
    %1444 = vmatpush.bf16.msra.mxu0 %v1228
    %1445 = vmatpush.bf16.msra.mxu0 %v1225
    %1446 = vmatpush.bf16.msra.mxu0 %v1222
    %1447 = vmatpush.bf16.msra.mxu0 %v1219
    %1448 = vmatpush.bf16.msra.mxu0 %v1216
    %1449 = vmatpush.bf16.msra.mxu0 %v1213
    %1450 = vmatpush.bf16.msra.mxu0 %v1210
    %1451 = vmatpush.bf16.msra.mxu0 %v1207
    %1452 = vmatmul.bf16.gmra.mxu0 %v855
    %v1453 = vpop.f32.mrf.mxu0
    %v1454 = vadd.f32 %v1440, %v1453
    %v1455 = vpop.f32.mrf.mxu0
    %v1456 = vadd.f32 %v1442, %v1455
    %1457 = vdwg.mxu0
    %1458 = vmatpush.bf16.msra.mxu0 %v1252
    %1459 = vmatpush.bf16.msra.mxu0 %v1249
    %1460 = vmatpush.bf16.msra.mxu0 %v1246
    %1461 = vmatpush.bf16.msra.mxu0 %v1243
    %1462 = vmatpush.bf16.msra.mxu0 %v1240
    %1463 = vmatpush.bf16.msra.mxu0 %v1237
    %1464 = vmatpush.bf16.msra.mxu0 %v1234
    %1465 = vmatpush.bf16.msra.mxu0 %v1231
    %1466 = vmatmul.bf16.gmra.mxu0 %v856
    %v1467 = vpop.f32.mrf.mxu0
    %v1468 = vadd.f32 %v1454, %v1467
    %v1469 = vpop.f32.mrf.mxu0
    %v1470 = vadd.f32 %v1456, %v1469
    %1471 = vdwg.mxu0
    %1472 = vmatpush.bf16.msra.mxu0 %v1276
    %1473 = vmatpush.bf16.msra.mxu0 %v1273
    %1474 = vmatpush.bf16.msra.mxu0 %v1270
    %1475 = vmatpush.bf16.msra.mxu0 %v1267
    %1476 = vmatpush.bf16.msra.mxu0 %v1264
    %1477 = vmatpush.bf16.msra.mxu0 %v1261
    %1478 = vmatpush.bf16.msra.mxu0 %v1258
    %1479 = vmatpush.bf16.msra.mxu0 %v1255
    %1480 = vmatmul.bf16.gmra.mxu0 %v857
    %v1481 = vpop.f32.mrf.mxu0
    %v1482 = vadd.f32 %v1468, %v1481
    %v1483 = vpop.f32.mrf.mxu0
    %v1484 = vadd.f32 %v1470, %v1483
    %1485 = vdwg.mxu0
    %1486 = vmatpush.bf16.msra.mxu0 %v1205
    %1487 = vmatpush.bf16.msra.mxu0 %v1202
    %1488 = vmatpush.bf16.msra.mxu0 %v1199
    %1489 = vmatpush.bf16.msra.mxu0 %v1196
    %1490 = vmatpush.bf16.msra.mxu0 %v1193
    %1491 = vmatpush.bf16.msra.mxu0 %v1190
    %1492 = vmatpush.bf16.msra.mxu0 %v1187
    %1493 = vmatpush.bf16.msra.mxu0 %v1184
    %1494 = vmatmul.bf16.gmra.mxu0 %v854
    %v1495 = vpop.f32.mrf.mxu0
    %v1496 = vadd.f32 %v838, %v1495
    %v1497 = vpop.f32.mrf.mxu0
    %v1498 = vadd.f32 %v838, %v1497
    %1499 = vdwg.mxu0
    %1500 = vmatpush.bf16.msra.mxu0 %v1229
    %1501 = vmatpush.bf16.msra.mxu0 %v1226
    %1502 = vmatpush.bf16.msra.mxu0 %v1223
    %1503 = vmatpush.bf16.msra.mxu0 %v1220
    %1504 = vmatpush.bf16.msra.mxu0 %v1217
    %1505 = vmatpush.bf16.msra.mxu0 %v1214
    %1506 = vmatpush.bf16.msra.mxu0 %v1211
    %1507 = vmatpush.bf16.msra.mxu0 %v1208
    %1508 = vmatmul.bf16.gmra.mxu0 %v855
    %v1509 = vpop.f32.mrf.mxu0
    %v1510 = vadd.f32 %v1496, %v1509
    %v1511 = vpop.f32.mrf.mxu0
    %v1512 = vadd.f32 %v1498, %v1511
    %1513 = vdwg.mxu0
    %1514 = vmatpush.bf16.msra.mxu0 %v1253
    %1515 = vmatpush.bf16.msra.mxu0 %v1250
    %1516 = vmatpush.bf16.msra.mxu0 %v1247
    %1517 = vmatpush.bf16.msra.mxu0 %v1244
    %1518 = vmatpush.bf16.msra.mxu0 %v1241
    %1519 = vmatpush.bf16.msra.mxu0 %v1238
    %1520 = vmatpush.bf16.msra.mxu0 %v1235
    %1521 = vmatpush.bf16.msra.mxu0 %v1232
    %1522 = vmatmul.bf16.gmra.mxu0 %v856
    %v1523 = vpop.f32.mrf.mxu0
    %v1524 = vadd.f32 %v1510, %v1523
    %v1525 = vpop.f32.mrf.mxu0
    %v1526 = vadd.f32 %v1512, %v1525
    %1527 = vdwg.mxu0
    %1528 = vmatpush.bf16.msra.mxu0 %v1277
    %1529 = vmatpush.bf16.msra.mxu0 %v1274
    %1530 = vmatpush.bf16.msra.mxu0 %v1271
    %1531 = vmatpush.bf16.msra.mxu0 %v1268
    %1532 = vmatpush.bf16.msra.mxu0 %v1265
    %1533 = vmatpush.bf16.msra.mxu0 %v1262
    %1534 = vmatpush.bf16.msra.mxu0 %v1259
    %1535 = vmatpush.bf16.msra.mxu0 %v1256
    %1536 = vmatmul.bf16.gmra.mxu0 %v857
    %v1537 = vpop.f32.mrf.mxu0
    %v1538 = vadd.f32 %v1524, %v1537
    %v1539 = vpop.f32.mrf.mxu0
    %v1540 = vadd.f32 %v1526, %v1539
    %1541 = vdwg.mxu0
    %v1542 = vmax.f32 %v1426, 0.0
    %v1543 = vmax.f32 %v1482, 0.0
    %v1544 = vmax.f32 %v1538, 0.0
    %v1545 = vmax.f32 %v1428, 0.0
    %v1546 = vmax.f32 %v1484, 0.0
    %v1547 = vmax.f32 %v1540, 0.0
    %v1548 = vpack.c.bf16 %v1545, %v1542
    %v1549 = vpack.c.bf16 %v1546, %v1543
    %v1550 = vpack.c.bf16 %v1547, %v1544
    %v1551 = vld [vmem:[#allocation10] sm:$0xff]
    %v1552 = vld [vmem:[#allocation10 + $0x8] sm:$0xf]
    %v1553 = vld [vmem:[#allocation10 + $0xc] sm:$0xff]
    %v1554 = vld [vmem:[#allocation10 + $0x14] sm:$0xf]
    %v1555 = vld [vmem:[#allocation10 + $0x18] sm:$0xff]
    %v1556 = vld [vmem:[#allocation10 + $0x20] sm:$0xf]
    %v1557 = vld [vmem:[#allocation10 + $0x24] sm:$0xff]
    %v1558 = vld [vmem:[#allocation10 + $0x2c] sm:$0xf]
    %v1559 = vld [vmem:[#allocation10 + $0x30] sm:$0xff]
    %v1560 = vld [vmem:[#allocation10 + $0x38] sm:$0xf]
    %v1561 = vld [vmem:[#allocation10 + $0x3c] sm:$0xff]
    %v1562 = vld [vmem:[#allocation10 + $0x44] sm:$0xf]
    %v1563 = vld [vmem:[#allocation10 + $0x48] sm:$0xff]
    %v1564 = vld [vmem:[#allocation10 + $0x50] sm:$0xf]
    %v1565 = vld [vmem:[#allocation10 + $0x54] sm:$0xff]
    %v1566 = vld [vmem:[#allocation10 + $0x5c] sm:$0xf]
    %v1567 = vld [vmem:[#allocation10 + $0x60] sm:$0xff]
    %v1568 = vld [vmem:[#allocation10 + $0x68] sm:$0xf]
    %v1569 = vld [vmem:[#allocation10 + $0x6c] sm:$0xff]
    %v1570 = vld [vmem:[#allocation10 + $0x74] sm:$0xf]
    %v1571 = vld [vmem:[#allocation10 + $0x78] sm:$0xff]
    %v1572 = vld [vmem:[#allocation10 + $0x80] sm:$0xf]
    %v1573 = vld [vmem:[#allocation10 + $0x84] sm:$0xff]
    %v1574 = vld [vmem:[#allocation10 + $0x8c] sm:$0xf]
    %v1575 = vld [vmem:[#allocation10 + $0x90] sm:$0xff]
    %v1576 = vld [vmem:[#allocation10 + $0x98] sm:$0xf]
    %v1577 = vld [vmem:[#allocation10 + $0x9c] sm:$0xff]
    %v1578 = vld [vmem:[#allocation10 + $0xa4] sm:$0xf]
    %v1579 = vld [vmem:[#allocation10 + $0xa8] sm:$0xff]
    %v1580 = vld [vmem:[#allocation10 + $0xb0] sm:$0xf]
    %v1581 = vld [vmem:[#allocation10 + $0xb4] sm:$0xff]
    %v1582 = vld [vmem:[#allocation10 + $0xbc] sm:$0xf]
    %v1583 = vld [vmem:[#allocation10 + $0xc0] sm:$0xff]
    %v1584 = vld [vmem:[#allocation10 + $0xc8] sm:$0xf]
    %v1585 = vld [vmem:[#allocation10 + $0xcc] sm:$0xff]
    %v1586 = vld [vmem:[#allocation10 + $0xd4] sm:$0xf]
    %v1587 = vld [vmem:[#allocation10 + $0xd8] sm:$0xff]
    %v1588 = vld [vmem:[#allocation10 + $0xe0] sm:$0xf]
    %v1589 = vld [vmem:[#allocation10 + $0xe4] sm:$0xff]
    %v1590 = vld [vmem:[#allocation10 + $0xec] sm:$0xf]
    %v1591 = vld [vmem:[#allocation10 + $0xf0] sm:$0xff]
    %v1592 = vld [vmem:[#allocation10 + $0xf8] sm:$0xf]
    %v1593 = vld [vmem:[#allocation10 + $0xfc] sm:$0xff]
    %v1594 = vld [vmem:[#allocation10 + $0x104] sm:$0xf]
    %v1595 = vld [vmem:[#allocation10 + $0x108] sm:$0xff]
    %v1596 = vld [vmem:[#allocation10 + $0x110] sm:$0xf]
    %v1597 = vld [vmem:[#allocation10 + $0x114] sm:$0xff]
    %v1598 = vld [vmem:[#allocation10 + $0x11c] sm:$0xf]
    %v1599 = vld [vmem:[#allocation10 + $0x120] sm:$0xff]
    %v1600 = vld [vmem:[#allocation10 + $0x128] sm:$0xf]
    %v1601 = vld [vmem:[#allocation10 + $0x12c] sm:$0xff]
    %v1602 = vld [vmem:[#allocation10 + $0x134] sm:$0xf]
    %v1603 = vld [vmem:[#allocation10 + $0x138] sm:$0xff]
    %v1604 = vld [vmem:[#allocation10 + $0x140] sm:$0xf]
    %v1605 = vld [vmem:[#allocation10 + $0x144] sm:$0xff]
    %v1606 = vld [vmem:[#allocation10 + $0x14c] sm:$0xf]
    %v1607 = vld [vmem:[#allocation10 + $0x150] sm:$0xff]
    %v1608 = vld [vmem:[#allocation10 + $0x158] sm:$0xf]
    %v1609 = vld [vmem:[#allocation10 + $0x15c] sm:$0xff]
    %v1610 = vld [vmem:[#allocation10 + $0x164] sm:$0xf]
    %v1611 = vld [vmem:[#allocation10 + $0x168] sm:$0xff]
    %v1612 = vld [vmem:[#allocation10 + $0x170] sm:$0xf]
    %v1613 = vld [vmem:[#allocation10 + $0x174] sm:$0xff]
    %v1614 = vld [vmem:[#allocation10 + $0x17c] sm:$0xf]
    %v1615 = vld [vmem:[#allocation10 + $0x180] sm:$0xff]
    %v1616 = vld [vmem:[#allocation10 + $0x188] sm:$0xf]
    %v1617 = vld [vmem:[#allocation10 + $0x18c] sm:$0xff]
    %v1618 = vld [vmem:[#allocation10 + $0x194] sm:$0xf]
    %v1619 = vld [vmem:[#allocation10 + $0x198] sm:$0xff]
    %v1620 = vld [vmem:[#allocation10 + $0x1a0] sm:$0xf]
    %v1621 = vld [vmem:[#allocation10 + $0x1a4] sm:$0xff]
    %v1622 = vld [vmem:[#allocation10 + $0x1ac] sm:$0xf]
    %v1623 = vld [vmem:[#allocation10 + $0x1b0] sm:$0xff]
    %v1624 = vld [vmem:[#allocation10 + $0x1b8] sm:$0xf]
    %v1625 = vld [vmem:[#allocation10 + $0x1bc] sm:$0xff]
    %v1626 = vld [vmem:[#allocation10 + $0x1c4] sm:$0xf]
    %v1627 = vld [vmem:[#allocation10 + $0x1c8] sm:$0xff]
    %v1628 = vld [vmem:[#allocation10 + $0x1d0] sm:$0xf]
    %v1629 = vld [vmem:[#allocation10 + $0x1d4] sm:$0xff]
    %v1630 = vld [vmem:[#allocation10 + $0x1dc] sm:$0xf]
    %v1631 = vld [vmem:[#allocation10 + $0x1e0] sm:$0xff]
    %v1632 = vld [vmem:[#allocation10 + $0x1e8] sm:$0xf]
    %v1633 = vld [vmem:[#allocation10 + $0x1ec] sm:$0xff]
    %v1634 = vld [vmem:[#allocation10 + $0x1f4] sm:$0xf]
    %v1635 = vld [vmem:[#allocation10 + $0x1f8] sm:$0xff]
    %v1636 = vld [vmem:[#allocation10 + $0x200] sm:$0xf]
    %v1637 = vld [vmem:[#allocation10 + $0x204] sm:$0xff]
    %v1638 = vld [vmem:[#allocation10 + $0x20c] sm:$0xf]
    %v1639 = vld [vmem:[#allocation10 + $0x210] sm:$0xff]
    %v1640 = vld [vmem:[#allocation10 + $0x218] sm:$0xf]
    %v1641 = vld [vmem:[#allocation10 + $0x21c] sm:$0xff]
    %v1642 = vld [vmem:[#allocation10 + $0x224] sm:$0xf]
    %v1643 = vld [vmem:[#allocation10 + $0x228] sm:$0xff]
    %v1644 = vld [vmem:[#allocation10 + $0x230] sm:$0xf]
    %v1645 = vld [vmem:[#allocation10 + $0x234] sm:$0xff]
    %v1646 = vld [vmem:[#allocation10 + $0x23c] sm:$0xf]
    %v1647 = vld [vmem:[#allocation10 + $0x240] sm:$0xff]
    %v1648 = vld [vmem:[#allocation10 + $0x248] sm:$0xf]
    %v1649 = vld [vmem:[#allocation10 + $0x24c] sm:$0xff]
    %v1650 = vld [vmem:[#allocation10 + $0x254] sm:$0xf]
    %v1651 = vld [vmem:[#allocation10 + $0x258] sm:$0xff]
    %v1652 = vld [vmem:[#allocation10 + $0x260] sm:$0xf]
    %v1653 = vld [vmem:[#allocation10 + $0x264] sm:$0xff]
    %v1654 = vld [vmem:[#allocation10 + $0x26c] sm:$0xf]
    %v1655 = vld [vmem:[#allocation10 + $0x270] sm:$0xff]
    %v1656 = vld [vmem:[#allocation10 + $0x278] sm:$0xf]
    %v1657 = vld [vmem:[#allocation10 + $0x27c] sm:$0xff]
    %v1658 = vld [vmem:[#allocation10 + $0x284] sm:$0xf]
    %v1659 = vld [vmem:[#allocation10 + $0x288] sm:$0xff]
    %v1660 = vld [vmem:[#allocation10 + $0x290] sm:$0xf]
    %v1661 = vld [vmem:[#allocation10 + $0x294] sm:$0xff]
    %v1662 = vld [vmem:[#allocation10 + $0x29c] sm:$0xf]
    %v1663 = vld [vmem:[#allocation10 + $0x2a0] sm:$0xff]
    %v1664 = vld [vmem:[#allocation10 + $0x2a8] sm:$0xf]
    %v1665 = vld [vmem:[#allocation10 + $0x2ac] sm:$0xff]
    %v1666 = vld [vmem:[#allocation10 + $0x2b4] sm:$0xf]
    %v1667 = vld [vmem:[#allocation10 + $0x2b8] sm:$0xff]
    %v1668 = vld [vmem:[#allocation10 + $0x2c0] sm:$0xf]
    %v1669 = vld [vmem:[#allocation10 + $0x2c4] sm:$0xff]
    %v1670 = vld [vmem:[#allocation10 + $0x2cc] sm:$0xf]
    %v1671 = vld [vmem:[#allocation10 + $0x2d0] sm:$0xff]
    %v1672 = vld [vmem:[#allocation10 + $0x2d8] sm:$0xf]
    %v1673 = vld [vmem:[#allocation10 + $0x2dc] sm:$0xff]
    %v1674 = vld [vmem:[#allocation10 + $0x2e4] sm:$0xf]
    %v1675 = vld [vmem:[#allocation10 + $0x2e8] sm:$0xff]
    %v1676 = vld [vmem:[#allocation10 + $0x2f0] sm:$0xf]
    %v1677 = vld [vmem:[#allocation10 + $0x2f4] sm:$0xff]
    %v1678 = vld [vmem:[#allocation10 + $0x2fc] sm:$0xf]
    %v1679 = vld [vmem:[#allocation11] sm:$0x7]
    %v1681 = vperm.slane %v1679, 0
    %v1682 = vperm.slane %v1679, 1
    %v1683 = vperm.slane %v1679, 2
    %v1691 = vunpack.c.l.b16 %v700
    %v1692 = vunpack.c.h.b16 %v700
    %v1693 = vunpack.c.l.b16 %v701
    %v1694 = vunpack.c.h.b16 %v701
    %v1695 = vunpack.c.l.b16 %v704
    %v1696 = vunpack.c.h.b16 %v704
    %v1697 = vunpack.c.l.b16 %v705
    %v1698 = vunpack.c.h.b16 %v705
    %v1699 = vpack.c.b16 %v1695, %v1691
    %v1700 = vpack.c.b16 %v1696, %v1692
    %v1701 = vpack.c.b16 %v1697, %v1693
    %v1702 = vpack.c.b16 %v1698, %v1694
    %v1835 = vunpack.c.l.b16 %v1551
    %v1836 = vunpack.c.h.b16 %v1551
    %v1837 = vunpack.c.l.b16 %v1552
    %v1838 = vunpack.c.l.b16 %v1553
    %v1839 = vunpack.c.h.b16 %v1553
    %v1840 = vunpack.c.l.b16 %v1554
    %v1841 = vunpack.c.l.b16 %v1555
    %v1842 = vunpack.c.h.b16 %v1555
    %v1843 = vunpack.c.l.b16 %v1556
    %v1844 = vunpack.c.l.b16 %v1557
    %v1845 = vunpack.c.h.b16 %v1557
    %v1846 = vunpack.c.l.b16 %v1558
    %v1847 = vunpack.c.l.b16 %v1559
    %v1848 = vunpack.c.h.b16 %v1559
    %v1849 = vunpack.c.l.b16 %v1560
    %v1850 = vunpack.c.l.b16 %v1561
    %v1851 = vunpack.c.h.b16 %v1561
    %v1852 = vunpack.c.l.b16 %v1562
    %v1853 = vunpack.c.l.b16 %v1563
    %v1854 = vunpack.c.h.b16 %v1563
    %v1855 = vunpack.c.l.b16 %v1564
    %v1856 = vunpack.c.l.b16 %v1565
    %v1857 = vunpack.c.h.b16 %v1565
    %v1858 = vunpack.c.l.b16 %v1566
    %v1859 = vunpack.c.l.b16 %v1567
    %v1860 = vunpack.c.h.b16 %v1567
    %v1861 = vunpack.c.l.b16 %v1568
    %v1862 = vunpack.c.l.b16 %v1569
    %v1863 = vunpack.c.h.b16 %v1569
    %v1864 = vunpack.c.l.b16 %v1570
    %v1865 = vunpack.c.l.b16 %v1571
    %v1866 = vunpack.c.h.b16 %v1571
    %v1867 = vunpack.c.l.b16 %v1572
    %v1868 = vunpack.c.l.b16 %v1573
    %v1869 = vunpack.c.h.b16 %v1573
    %v1870 = vunpack.c.l.b16 %v1574
    %v1871 = vunpack.c.l.b16 %v1575
    %v1872 = vunpack.c.h.b16 %v1575
    %v1873 = vunpack.c.l.b16 %v1576
    %v1874 = vunpack.c.l.b16 %v1577
    %v1875 = vunpack.c.h.b16 %v1577
    %v1876 = vunpack.c.l.b16 %v1578
    %v1877 = vunpack.c.l.b16 %v1579
    %v1878 = vunpack.c.h.b16 %v1579
    %v1879 = vunpack.c.l.b16 %v1580
    %v1880 = vunpack.c.l.b16 %v1581
    %v1881 = vunpack.c.h.b16 %v1581
    %v1882 = vunpack.c.l.b16 %v1582
    %v1883 = vunpack.c.l.b16 %v1583
    %v1884 = vunpack.c.h.b16 %v1583
    %v1885 = vunpack.c.l.b16 %v1584
    %v1886 = vunpack.c.l.b16 %v1585
    %v1887 = vunpack.c.h.b16 %v1585
    %v1888 = vunpack.c.l.b16 %v1586
    %v1889 = vunpack.c.l.b16 %v1587
    %v1890 = vunpack.c.h.b16 %v1587
    %v1891 = vunpack.c.l.b16 %v1588
    %v1892 = vunpack.c.l.b16 %v1589
    %v1893 = vunpack.c.h.b16 %v1589
    %v1894 = vunpack.c.l.b16 %v1590
    %v1895 = vunpack.c.l.b16 %v1591
    %v1896 = vunpack.c.h.b16 %v1591
    %v1897 = vunpack.c.l.b16 %v1592
    %v1898 = vunpack.c.l.b16 %v1593
    %v1899 = vunpack.c.h.b16 %v1593
    %v1900 = vunpack.c.l.b16 %v1594
    %v1901 = vunpack.c.l.b16 %v1595
    %v1902 = vunpack.c.h.b16 %v1595
    %v1903 = vunpack.c.l.b16 %v1596
    %v1904 = vunpack.c.l.b16 %v1597
    %v1905 = vunpack.c.h.b16 %v1597
    %v1906 = vunpack.c.l.b16 %v1598
    %v1907 = vunpack.c.l.b16 %v1599
    %v1908 = vunpack.c.h.b16 %v1599
    %v1909 = vunpack.c.l.b16 %v1600
    %v1910 = vunpack.c.l.b16 %v1601
    %v1911 = vunpack.c.h.b16 %v1601
    %v1912 = vunpack.c.l.b16 %v1602
    %v1913 = vunpack.c.l.b16 %v1603
    %v1914 = vunpack.c.h.b16 %v1603
    %v1915 = vunpack.c.l.b16 %v1604
    %v1916 = vunpack.c.l.b16 %v1605
    %v1917 = vunpack.c.h.b16 %v1605
    %v1918 = vunpack.c.l.b16 %v1606
    %v1919 = vunpack.c.l.b16 %v1607
    %v1920 = vunpack.c.h.b16 %v1607
    %v1921 = vunpack.c.l.b16 %v1608
    %v1922 = vunpack.c.l.b16 %v1609
    %v1923 = vunpack.c.h.b16 %v1609
    %v1924 = vunpack.c.l.b16 %v1610
    %v1925 = vunpack.c.l.b16 %v1611
    %v1926 = vunpack.c.h.b16 %v1611
    %v1927 = vunpack.c.l.b16 %v1612
    %v1928 = vunpack.c.l.b16 %v1613
    %v1929 = vunpack.c.h.b16 %v1613
    %v1930 = vunpack.c.l.b16 %v1614
    %v1931 = vunpack.c.l.b16 %v1615
    %v1932 = vunpack.c.h.b16 %v1615
    %v1933 = vunpack.c.l.b16 %v1616
    %v1934 = vunpack.c.l.b16 %v1617
    %v1935 = vunpack.c.h.b16 %v1617
    %v1936 = vunpack.c.l.b16 %v1618
    %v1937 = vunpack.c.l.b16 %v1619
    %v1938 = vunpack.c.h.b16 %v1619
    %v1939 = vunpack.c.l.b16 %v1620
    %v1940 = vunpack.c.l.b16 %v1621
    %v1941 = vunpack.c.h.b16 %v1621
    %v1942 = vunpack.c.l.b16 %v1622
    %v1943 = vunpack.c.l.b16 %v1623
    %v1944 = vunpack.c.h.b16 %v1623
    %v1945 = vunpack.c.l.b16 %v1624
    %v1946 = vunpack.c.l.b16 %v1625
    %v1947 = vunpack.c.h.b16 %v1625
    %v1948 = vunpack.c.l.b16 %v1626
    %v1949 = vunpack.c.l.b16 %v1627
    %v1950 = vunpack.c.h.b16 %v1627
    %v1951 = vunpack.c.l.b16 %v1628
    %v1952 = vunpack.c.l.b16 %v1629
    %v1953 = vunpack.c.h.b16 %v1629
    %v1954 = vunpack.c.l.b16 %v1630
    %v1955 = vunpack.c.l.b16 %v1631
    %v1956 = vunpack.c.h.b16 %v1631
    %v1957 = vunpack.c.l.b16 %v1632
    %v1958 = vunpack.c.l.b16 %v1633
    %v1959 = vunpack.c.h.b16 %v1633
    %v1960 = vunpack.c.l.b16 %v1634
    %v1961 = vunpack.c.l.b16 %v1635
    %v1962 = vunpack.c.h.b16 %v1635
    %v1963 = vunpack.c.l.b16 %v1636
    %v1964 = vunpack.c.l.b16 %v1637
    %v1965 = vunpack.c.h.b16 %v1637
    %v1966 = vunpack.c.l.b16 %v1638
    %v1967 = vunpack.c.l.b16 %v1639
    %v1968 = vunpack.c.h.b16 %v1639
    %v1969 = vunpack.c.l.b16 %v1640
    %v1970 = vunpack.c.l.b16 %v1641
    %v1971 = vunpack.c.h.b16 %v1641
    %v1972 = vunpack.c.l.b16 %v1642
    %v1973 = vunpack.c.l.b16 %v1643
    %v1974 = vunpack.c.h.b16 %v1643
    %v1975 = vunpack.c.l.b16 %v1644
    %v1976 = vunpack.c.l.b16 %v1645
    %v1977 = vunpack.c.h.b16 %v1645
    %v1978 = vunpack.c.l.b16 %v1646
    %v1979 = vunpack.c.l.b16 %v1647
    %v1980 = vunpack.c.h.b16 %v1647
    %v1981 = vunpack.c.l.b16 %v1648
    %v1982 = vunpack.c.l.b16 %v1649
    %v1983 = vunpack.c.h.b16 %v1649
    %v1984 = vunpack.c.l.b16 %v1650
    %v1985 = vunpack.c.l.b16 %v1651
    %v1986 = vunpack.c.h.b16 %v1651
    %v1987 = vunpack.c.l.b16 %v1652
    %v1988 = vunpack.c.l.b16 %v1653
    %v1989 = vunpack.c.h.b16 %v1653
    %v1990 = vunpack.c.l.b16 %v1654
    %v1991 = vunpack.c.l.b16 %v1655
    %v1992 = vunpack.c.h.b16 %v1655
    %v1993 = vunpack.c.l.b16 %v1656
    %v1994 = vunpack.c.l.b16 %v1657
    %v1995 = vunpack.c.h.b16 %v1657
    %v1996 = vunpack.c.l.b16 %v1658
    %v1997 = vunpack.c.l.b16 %v1659
    %v1998 = vunpack.c.h.b16 %v1659
    %v1999 = vunpack.c.l.b16 %v1660
    %v2000 = vunpack.c.l.b16 %v1661
    %v2001 = vunpack.c.h.b16 %v1661
    %v2002 = vunpack.c.l.b16 %v1662
    %v2003 = vunpack.c.l.b16 %v1663
    %v2004 = vunpack.c.h.b16 %v1663
    %v2005 = vunpack.c.l.b16 %v1664
    %v2006 = vunpack.c.l.b16 %v1665
    %v2007 = vunpack.c.h.b16 %v1665
    %v2008 = vunpack.c.l.b16 %v1666
    %v2009 = vunpack.c.l.b16 %v1667
    %v2010 = vunpack.c.h.b16 %v1667
    %v2011 = vunpack.c.l.b16 %v1668
    %v2012 = vunpack.c.l.b16 %v1669
    %v2013 = vunpack.c.h.b16 %v1669
    %v2014 = vunpack.c.l.b16 %v1670
    %v2015 = vunpack.c.l.b16 %v1671
    %v2016 = vunpack.c.h.b16 %v1671
    %v2017 = vunpack.c.l.b16 %v1672
    %v2018 = vunpack.c.l.b16 %v1673
    %v2019 = vunpack.c.h.b16 %v1673
    %v2020 = vunpack.c.l.b16 %v1674
    %v2021 = vunpack.c.l.b16 %v1675
    %v2022 = vunpack.c.h.b16 %v1675
    %v2023 = vunpack.c.l.b16 %v1676
    %v2024 = vunpack.c.l.b16 %v1677
    %v2025 = vunpack.c.h.b16 %v1677
    %v2026 = vunpack.c.l.b16 %v1678
    %v2027 = vpack.c.b16 %v1838, %v1835
    %v2028 = vpack.c.b16 %v1839, %v1836
    %v2029 = vpack.c.b16 %v1840, %v1837
    %v2030 = vpack.c.b16 %v1844, %v1841
    %v2031 = vpack.c.b16 %v1845, %v1842
    %v2032 = vpack.c.b16 %v1846, %v1843
    %v2033 = vpack.c.b16 %v1850, %v1847
    %v2034 = vpack.c.b16 %v1851, %v1848
    %v2035 = vpack.c.b16 %v1852, %v1849
    %v2036 = vpack.c.b16 %v1856, %v1853
    %v2037 = vpack.c.b16 %v1857, %v1854
    %v2038 = vpack.c.b16 %v1858, %v1855
    %v2039 = vpack.c.b16 %v1862, %v1859
    %v2040 = vpack.c.b16 %v1863, %v1860
    %v2041 = vpack.c.b16 %v1864, %v1861
    %v2042 = vpack.c.b16 %v1868, %v1865
    %v2043 = vpack.c.b16 %v1869, %v1866
    %v2044 = vpack.c.b16 %v1870, %v1867
    %v2045 = vpack.c.b16 %v1874, %v1871
    %v2046 = vpack.c.b16 %v1875, %v1872
    %v2047 = vpack.c.b16 %v1876, %v1873
    %v2048 = vpack.c.b16 %v1880, %v1877
    %v2049 = vpack.c.b16 %v1881, %v1878
    %v2050 = vpack.c.b16 %v1882, %v1879
    %v2051 = vpack.c.b16 %v1886, %v1883
    %v2052 = vpack.c.b16 %v1887, %v1884
    %v2053 = vpack.c.b16 %v1888, %v1885
    %v2054 = vpack.c.b16 %v1892, %v1889
    %v2055 = vpack.c.b16 %v1893, %v1890
    %v2056 = vpack.c.b16 %v1894, %v1891
    %v2057 = vpack.c.b16 %v1898, %v1895
    %v2058 = vpack.c.b16 %v1899, %v1896
    %v2059 = vpack.c.b16 %v1900, %v1897
    %v2060 = vpack.c.b16 %v1904, %v1901
    %v2061 = vpack.c.b16 %v1905, %v1902
    %v2062 = vpack.c.b16 %v1906, %v1903
    %v2063 = vpack.c.b16 %v1910, %v1907
    %v2064 = vpack.c.b16 %v1911, %v1908
    %v2065 = vpack.c.b16 %v1912, %v1909
    %v2066 = vpack.c.b16 %v1916, %v1913
    %v2067 = vpack.c.b16 %v1917, %v1914
    %v2068 = vpack.c.b16 %v1918, %v1915
    %v2069 = vpack.c.b16 %v1922, %v1919
    %v2070 = vpack.c.b16 %v1923, %v1920
    %v2071 = vpack.c.b16 %v1924, %v1921
    %v2072 = vpack.c.b16 %v1928, %v1925
    %v2073 = vpack.c.b16 %v1929, %v1926
    %v2074 = vpack.c.b16 %v1930, %v1927
    %v2075 = vpack.c.b16 %v1934, %v1931
    %v2076 = vpack.c.b16 %v1935, %v1932
    %v2077 = vpack.c.b16 %v1936, %v1933
    %v2078 = vpack.c.b16 %v1940, %v1937
    %v2079 = vpack.c.b16 %v1941, %v1938
    %v2080 = vpack.c.b16 %v1942, %v1939
    %v2081 = vpack.c.b16 %v1946, %v1943
    %v2082 = vpack.c.b16 %v1947, %v1944
    %v2083 = vpack.c.b16 %v1948, %v1945
    %v2084 = vpack.c.b16 %v1952, %v1949
    %v2085 = vpack.c.b16 %v1953, %v1950
    %v2086 = vpack.c.b16 %v1954, %v1951
    %v2087 = vpack.c.b16 %v1958, %v1955
    %v2088 = vpack.c.b16 %v1959, %v1956
    %v2089 = vpack.c.b16 %v1960, %v1957
    %v2090 = vpack.c.b16 %v1964, %v1961
    %v2091 = vpack.c.b16 %v1965, %v1962
    %v2092 = vpack.c.b16 %v1966, %v1963
    %v2093 = vpack.c.b16 %v1970, %v1967
    %v2094 = vpack.c.b16 %v1971, %v1968
    %v2095 = vpack.c.b16 %v1972, %v1969
    %v2096 = vpack.c.b16 %v1976, %v1973
    %v2097 = vpack.c.b16 %v1977, %v1974
    %v2098 = vpack.c.b16 %v1978, %v1975
    %v2099 = vpack.c.b16 %v1982, %v1979
    %v2100 = vpack.c.b16 %v1983, %v1980
    %v2101 = vpack.c.b16 %v1984, %v1981
    %v2102 = vpack.c.b16 %v1988, %v1985
    %v2103 = vpack.c.b16 %v1989, %v1986
    %v2104 = vpack.c.b16 %v1990, %v1987
    %v2105 = vpack.c.b16 %v1994, %v1991
    %v2106 = vpack.c.b16 %v1995, %v1992
    %v2107 = vpack.c.b16 %v1996, %v1993
    %v2108 = vpack.c.b16 %v2000, %v1997
    %v2109 = vpack.c.b16 %v2001, %v1998
    %v2110 = vpack.c.b16 %v2002, %v1999
    %v2111 = vpack.c.b16 %v2006, %v2003
    %v2112 = vpack.c.b16 %v2007, %v2004
    %v2113 = vpack.c.b16 %v2008, %v2005
    %v2114 = vpack.c.b16 %v2012, %v2009
    %v2115 = vpack.c.b16 %v2013, %v2010
    %v2116 = vpack.c.b16 %v2014, %v2011
    %v2117 = vpack.c.b16 %v2018, %v2015
    %v2118 = vpack.c.b16 %v2019, %v2016
    %v2119 = vpack.c.b16 %v2020, %v2017
    %v2120 = vpack.c.b16 %v2024, %v2021
    %v2121 = vpack.c.b16 %v2025, %v2022
    %v2122 = vpack.c.b16 %v2026, %v2023
    %2219 = vmatpush.bf16.msra.mxu0 %v2048
    %2220 = vmatpush.bf16.msra.mxu0 %v2045
    %2221 = vmatpush.bf16.msra.mxu0 %v2042
    %2222 = vmatpush.bf16.msra.mxu0 %v2039
    %2223 = vmatpush.bf16.msra.mxu0 %v2036
    %2224 = vmatpush.bf16.msra.mxu0 %v2033
    %2225 = vmatpush.bf16.msra.mxu0 %v2030
    %2226 = vmatpush.bf16.msra.mxu0 %v2027
    %2227 = vmatmul.bf16.gmra.mxu0 %v1699
    %v2228 = vpop.f32.mrf.mxu0
    %v2229 = vadd.f32 %v1681, %v2228
    %v2230 = vpop.f32.mrf.mxu0
    %v2231 = vadd.f32 %v1681, %v2230
    %2232 = vdwg.mxu0
    %2233 = vmatpush.bf16.msra.mxu0 %v2072
    %2234 = vmatpush.bf16.msra.mxu0 %v2069
    %2235 = vmatpush.bf16.msra.mxu0 %v2066
    %2236 = vmatpush.bf16.msra.mxu0 %v2063
    %2237 = vmatpush.bf16.msra.mxu0 %v2060
    %2238 = vmatpush.bf16.msra.mxu0 %v2057
    %2239 = vmatpush.bf16.msra.mxu0 %v2054
    %2240 = vmatpush.bf16.msra.mxu0 %v2051
    %2241 = vmatmul.bf16.gmra.mxu0 %v1700
    %v2242 = vpop.f32.mrf.mxu0
    %v2243 = vadd.f32 %v2229, %v2242
    %v2244 = vpop.f32.mrf.mxu0
    %v2245 = vadd.f32 %v2231, %v2244
    %2246 = vdwg.mxu0
    %2247 = vmatpush.bf16.msra.mxu0 %v2096
    %2248 = vmatpush.bf16.msra.mxu0 %v2093
    %2249 = vmatpush.bf16.msra.mxu0 %v2090
    %2250 = vmatpush.bf16.msra.mxu0 %v2087
    %2251 = vmatpush.bf16.msra.mxu0 %v2084
    %2252 = vmatpush.bf16.msra.mxu0 %v2081
    %2253 = vmatpush.bf16.msra.mxu0 %v2078
    %2254 = vmatpush.bf16.msra.mxu0 %v2075
    %2255 = vmatmul.bf16.gmra.mxu0 %v1701
    %v2256 = vpop.f32.mrf.mxu0
    %v2257 = vadd.f32 %v2243, %v2256
    %v2258 = vpop.f32.mrf.mxu0
    %v2259 = vadd.f32 %v2245, %v2258
    %2260 = vdwg.mxu0
    %2261 = vmatpush.bf16.msra.mxu0 %v2120
    %2262 = vmatpush.bf16.msra.mxu0 %v2117
    %2263 = vmatpush.bf16.msra.mxu0 %v2114
    %2264 = vmatpush.bf16.msra.mxu0 %v2111
    %2265 = vmatpush.bf16.msra.mxu0 %v2108
    %2266 = vmatpush.bf16.msra.mxu0 %v2105
    %2267 = vmatpush.bf16.msra.mxu0 %v2102
    %2268 = vmatpush.bf16.msra.mxu0 %v2099
    %2269 = vmatmul.bf16.gmra.mxu0 %v1702
    %v2270 = vpop.f32.mrf.mxu0
    %v2271 = vadd.f32 %v2257, %v2270
    %v2272 = vpop.f32.mrf.mxu0
    %v2273 = vadd.f32 %v2259, %v2272
    %2274 = vdwg.mxu0
    %2275 = vmatpush.bf16.msra.mxu0 %v2049
    %2276 = vmatpush.bf16.msra.mxu0 %v2046
    %2277 = vmatpush.bf16.msra.mxu0 %v2043
    %2278 = vmatpush.bf16.msra.mxu0 %v2040
    %2279 = vmatpush.bf16.msra.mxu0 %v2037
    %2280 = vmatpush.bf16.msra.mxu0 %v2034
    %2281 = vmatpush.bf16.msra.mxu0 %v2031
    %2282 = vmatpush.bf16.msra.mxu0 %v2028
    %2283 = vmatmul.bf16.gmra.mxu0 %v1699
    %v2284 = vpop.f32.mrf.mxu0
    %v2285 = vadd.f32 %v1682, %v2284
    %v2286 = vpop.f32.mrf.mxu0
    %v2287 = vadd.f32 %v1682, %v2286
    %2288 = vdwg.mxu0
    %2289 = vmatpush.bf16.msra.mxu0 %v2073
    %2290 = vmatpush.bf16.msra.mxu0 %v2070
    %2291 = vmatpush.bf16.msra.mxu0 %v2067
    %2292 = vmatpush.bf16.msra.mxu0 %v2064
    %2293 = vmatpush.bf16.msra.mxu0 %v2061
    %2294 = vmatpush.bf16.msra.mxu0 %v2058
    %2295 = vmatpush.bf16.msra.mxu0 %v2055
    %2296 = vmatpush.bf16.msra.mxu0 %v2052
    %2297 = vmatmul.bf16.gmra.mxu0 %v1700
    %v2298 = vpop.f32.mrf.mxu0
    %v2299 = vadd.f32 %v2285, %v2298
    %v2300 = vpop.f32.mrf.mxu0
    %v2301 = vadd.f32 %v2287, %v2300
    %2302 = vdwg.mxu0
    %2303 = vmatpush.bf16.msra.mxu0 %v2097
    %2304 = vmatpush.bf16.msra.mxu0 %v2094
    %2305 = vmatpush.bf16.msra.mxu0 %v2091
    %2306 = vmatpush.bf16.msra.mxu0 %v2088
    %2307 = vmatpush.bf16.msra.mxu0 %v2085
    %2308 = vmatpush.bf16.msra.mxu0 %v2082
    %2309 = vmatpush.bf16.msra.mxu0 %v2079
    %2310 = vmatpush.bf16.msra.mxu0 %v2076
    %2311 = vmatmul.bf16.gmra.mxu0 %v1701
    %v2312 = vpop.f32.mrf.mxu0
    %v2313 = vadd.f32 %v2299, %v2312
    %v2314 = vpop.f32.mrf.mxu0
    %v2315 = vadd.f32 %v2301, %v2314
    %2316 = vdwg.mxu0
    %2317 = vmatpush.bf16.msra.mxu0 %v2121
    %2318 = vmatpush.bf16.msra.mxu0 %v2118
    %2319 = vmatpush.bf16.msra.mxu0 %v2115
    %2320 = vmatpush.bf16.msra.mxu0 %v2112
    %2321 = vmatpush.bf16.msra.mxu0 %v2109
    %2322 = vmatpush.bf16.msra.mxu0 %v2106
    %2323 = vmatpush.bf16.msra.mxu0 %v2103
    %2324 = vmatpush.bf16.msra.mxu0 %v2100
    %2325 = vmatmul.bf16.gmra.mxu0 %v1702
    %v2326 = vpop.f32.mrf.mxu0
    %v2327 = vadd.f32 %v2313, %v2326
    %v2328 = vpop.f32.mrf.mxu0
    %v2329 = vadd.f32 %v2315, %v2328
    %2330 = vdwg.mxu0
    %2331 = vmatpush.bf16.msra.mxu0 %v2050
    %2332 = vmatpush.bf16.msra.mxu0 %v2047
    %2333 = vmatpush.bf16.msra.mxu0 %v2044
    %2334 = vmatpush.bf16.msra.mxu0 %v2041
    %2335 = vmatpush.bf16.msra.mxu0 %v2038
    %2336 = vmatpush.bf16.msra.mxu0 %v2035
    %2337 = vmatpush.bf16.msra.mxu0 %v2032
    %2338 = vmatpush.bf16.msra.mxu0 %v2029
    %2339 = vmatmul.bf16.gmra.mxu0 %v1699
    %v2340 = vpop.f32.mrf.mxu0
    %v2341 = vadd.f32 %v1683, %v2340
    %v2342 = vpop.f32.mrf.mxu0
    %v2343 = vadd.f32 %v1683, %v2342
    %2344 = vdwg.mxu0
    %2345 = vmatpush.bf16.msra.mxu0 %v2074
    %2346 = vmatpush.bf16.msra.mxu0 %v2071
    %2347 = vmatpush.bf16.msra.mxu0 %v2068
    %2348 = vmatpush.bf16.msra.mxu0 %v2065
    %2349 = vmatpush.bf16.msra.mxu0 %v2062
    %2350 = vmatpush.bf16.msra.mxu0 %v2059
    %2351 = vmatpush.bf16.msra.mxu0 %v2056
    %2352 = vmatpush.bf16.msra.mxu0 %v2053
    %2353 = vmatmul.bf16.gmra.mxu0 %v1700
    %v2354 = vpop.f32.mrf.mxu0
    %v2355 = vadd.f32 %v2341, %v2354
    %v2356 = vpop.f32.mrf.mxu0
    %v2357 = vadd.f32 %v2343, %v2356
    %2358 = vdwg.mxu0
    %2359 = vmatpush.bf16.msra.mxu0 %v2098
    %2360 = vmatpush.bf16.msra.mxu0 %v2095
    %2361 = vmatpush.bf16.msra.mxu0 %v2092
    %2362 = vmatpush.bf16.msra.mxu0 %v2089
    %2363 = vmatpush.bf16.msra.mxu0 %v2086
    %2364 = vmatpush.bf16.msra.mxu0 %v2083
    %2365 = vmatpush.bf16.msra.mxu0 %v2080
    %2366 = vmatpush.bf16.msra.mxu0 %v2077
    %2367 = vmatmul.bf16.gmra.mxu0 %v1701
    %v2368 = vpop.f32.mrf.mxu0
    %v2369 = vadd.f32 %v2355, %v2368
    %v2370 = vpop.f32.mrf.mxu0
    %v2371 = vadd.f32 %v2357, %v2370
    %2372 = vdwg.mxu0
    %2373 = vmatpush.bf16.msra.mxu0 %v2122
    %2374 = vmatpush.bf16.msra.mxu0 %v2119
    %2375 = vmatpush.bf16.msra.mxu0 %v2116
    %2376 = vmatpush.bf16.msra.mxu0 %v2113
    %2377 = vmatpush.bf16.msra.mxu0 %v2110
    %2378 = vmatpush.bf16.msra.mxu0 %v2107
    %2379 = vmatpush.bf16.msra.mxu0 %v2104
    %2380 = vmatpush.bf16.msra.mxu0 %v2101
    %2381 = vmatmul.bf16.gmra.mxu0 %v1702
    %v2382 = vpop.f32.mrf.mxu0
    %v2383 = vadd.f32 %v2369, %v2382
    %v2384 = vpop.f32.mrf.mxu0
    %v2385 = vadd.f32 %v2371, %v2384
    %2386 = vdwg.mxu0
    %v2387 = vmax.f32 %v2271, 0.0
    %v2388 = vmax.f32 %v2327, 0.0
    %v2389 = vmax.f32 %v2383, 0.0
    %v2390 = vmax.f32 %v2273, 0.0
    %v2391 = vmax.f32 %v2329, 0.0
    %v2392 = vmax.f32 %v2385, 0.0
    %v2393 = vpack.c.bf16 %v2390, %v2387
    %v2394 = vpack.c.bf16 %v2391, %v2388
    %v2395 = vpack.c.bf16 %v2392, %v2389
    %v2396 = vld [vmem:[#allocation13] sm:$0xf]
    %v2397 = vld [vmem:[#allocation13 + $0x4] sm:$0xf]
    %v2398 = vld [vmem:[#allocation13 + $0x8] sm:$0xf]
    %v2399 = vld [vmem:[#allocation13 + $0xc] sm:$0xf]
    %v2400 = vld [vmem:[#allocation13 + $0x10] sm:$0xf]
    %v2401 = vld [vmem:[#allocation13 + $0x14] sm:$0xf]
    %v2402 = vld [vmem:[#allocation13 + $0x18] sm:$0xf]
    %v2403 = vld [vmem:[#allocation13 + $0x1c] sm:$0xf]
    %v2404 = vld [vmem:[#allocation13 + $0x20] sm:$0xf]
    %v2405 = vld [vmem:[#allocation13 + $0x24] sm:$0xf]
    %v2406 = vld [vmem:[#allocation13 + $0x28] sm:$0xf]
    %v2407 = vld [vmem:[#allocation13 + $0x2c] sm:$0xf]
    %v2408 = vld [vmem:[#allocation13 + $0x30] sm:$0xf]
    %v2409 = vld [vmem:[#allocation13 + $0x34] sm:$0xf]
    %v2410 = vld [vmem:[#allocation13 + $0x38] sm:$0xf]
    %v2411 = vld [vmem:[#allocation13 + $0x3c] sm:$0xf]
    %v2412 = vld [vmem:[#allocation13 + $0x40] sm:$0xf]
    %v2413 = vld [vmem:[#allocation13 + $0x44] sm:$0xf]
    %v2414 = vld [vmem:[#allocation13 + $0x48] sm:$0xf]
    %v2415 = vld [vmem:[#allocation13 + $0x4c] sm:$0xf]
    %v2416 = vld [vmem:[#allocation13 + $0x50] sm:$0xf]
    %v2417 = vld [vmem:[#allocation13 + $0x54] sm:$0xf]
    %v2418 = vld [vmem:[#allocation13 + $0x58] sm:$0xf]
    %v2419 = vld [vmem:[#allocation13 + $0x5c] sm:$0xf]
    %v2420 = vld [vmem:[#allocation13 + $0x60] sm:$0xf]
    %v2421 = vld [vmem:[#allocation13 + $0x64] sm:$0xf]
    %v2422 = vld [vmem:[#allocation13 + $0x68] sm:$0xf]
    %v2423 = vld [vmem:[#allocation13 + $0x6c] sm:$0xf]
    %v2424 = vld [vmem:[#allocation13 + $0x70] sm:$0xf]
    %v2425 = vld [vmem:[#allocation13 + $0x74] sm:$0xf]
    %v2426 = vld [vmem:[#allocation13 + $0x78] sm:$0xf]
    %v2427 = vld [vmem:[#allocation13 + $0x7c] sm:$0xf]
    %v2428 = vld [vmem:[#allocation13 + $0x80] sm:$0xf]
    %v2429 = vld [vmem:[#allocation13 + $0x84] sm:$0xf]
    %v2430 = vld [vmem:[#allocation13 + $0x88] sm:$0xf]
    %v2431 = vld [vmem:[#allocation13 + $0x8c] sm:$0xf]
    %v2432 = vld [vmem:[#allocation13 + $0x90] sm:$0xf]
    %v2433 = vld [vmem:[#allocation13 + $0x94] sm:$0xf]
    %v2434 = vld [vmem:[#allocation13 + $0x98] sm:$0xf]
    %v2435 = vld [vmem:[#allocation13 + $0x9c] sm:$0xf]
    %v2436 = vld [vmem:[#allocation13 + $0xa0] sm:$0xf]
    %v2437 = vld [vmem:[#allocation13 + $0xa4] sm:$0xf]
    %v2438 = vld [vmem:[#allocation13 + $0xa8] sm:$0xf]
    %v2439 = vld [vmem:[#allocation13 + $0xac] sm:$0xf]
    %v2440 = vld [vmem:[#allocation13 + $0xb0] sm:$0xf]
    %v2441 = vld [vmem:[#allocation13 + $0xb4] sm:$0xf]
    %v2442 = vld [vmem:[#allocation13 + $0xb8] sm:$0xf]
    %v2443 = vld [vmem:[#allocation13 + $0xbc] sm:$0xf]
    %v2444 = vld [vmem:[%s8] sm:$0x1]
    %v2446 = vperm.slane %v2444, 0
    %v2496 = vunpack.c.l.b16 %v2396
    %v2497 = vunpack.c.l.b16 %v2397
    %v2498 = vunpack.c.l.b16 %v2398
    %v2499 = vunpack.c.l.b16 %v2399
    %v2500 = vunpack.c.l.b16 %v2400
    %v2501 = vunpack.c.l.b16 %v2401
    %v2502 = vunpack.c.l.b16 %v2402
    %v2503 = vunpack.c.l.b16 %v2403
    %v2504 = vunpack.c.l.b16 %v2404
    %v2505 = vunpack.c.l.b16 %v2405
    %v2506 = vunpack.c.l.b16 %v2406
    %v2507 = vunpack.c.l.b16 %v2407
    %v2508 = vunpack.c.l.b16 %v2408
    %v2509 = vunpack.c.l.b16 %v2409
    %v2510 = vunpack.c.l.b16 %v2410
    %v2511 = vunpack.c.l.b16 %v2411
    %v2512 = vunpack.c.l.b16 %v2412
    %v2513 = vunpack.c.l.b16 %v2413
    %v2514 = vunpack.c.l.b16 %v2414
    %v2515 = vunpack.c.l.b16 %v2415
    %v2516 = vunpack.c.l.b16 %v2416
    %v2517 = vunpack.c.l.b16 %v2417
    %v2518 = vunpack.c.l.b16 %v2418
    %v2519 = vunpack.c.l.b16 %v2419
    %v2520 = vunpack.c.l.b16 %v2420
    %v2521 = vunpack.c.l.b16 %v2421
    %v2522 = vunpack.c.l.b16 %v2422
    %v2523 = vunpack.c.l.b16 %v2423
    %v2524 = vunpack.c.l.b16 %v2424
    %v2525 = vunpack.c.l.b16 %v2425
    %v2526 = vunpack.c.l.b16 %v2426
    %v2527 = vunpack.c.l.b16 %v2427
    %v2528 = vunpack.c.l.b16 %v2428
    %v2529 = vunpack.c.l.b16 %v2429
    %v2530 = vunpack.c.l.b16 %v2430
    %v2531 = vunpack.c.l.b16 %v2431
    %v2532 = vunpack.c.l.b16 %v2432
    %v2533 = vunpack.c.l.b16 %v2433
    %v2534 = vunpack.c.l.b16 %v2434
    %v2535 = vunpack.c.l.b16 %v2435
    %v2536 = vunpack.c.l.b16 %v2436
    %v2537 = vunpack.c.l.b16 %v2437
    %v2538 = vunpack.c.l.b16 %v2438
    %v2539 = vunpack.c.l.b16 %v2439
    %v2540 = vunpack.c.l.b16 %v2440
    %v2541 = vunpack.c.l.b16 %v2441
    %v2542 = vunpack.c.l.b16 %v2442
    %v2543 = vunpack.c.l.b16 %v2443
    %v2544 = vpack.c.b16 %v2497, %v2496
    %v2545 = vpack.c.b16 %v2499, %v2498
    %v2546 = vpack.c.b16 %v2501, %v2500
    %v2547 = vpack.c.b16 %v2503, %v2502
    %v2548 = vpack.c.b16 %v2505, %v2504
    %v2549 = vpack.c.b16 %v2507, %v2506
    %v2550 = vpack.c.b16 %v2509, %v2508
    %v2551 = vpack.c.b16 %v2511, %v2510
    %v2552 = vpack.c.b16 %v2513, %v2512
    %v2553 = vpack.c.b16 %v2515, %v2514
    %v2554 = vpack.c.b16 %v2517, %v2516
    %v2555 = vpack.c.b16 %v2519, %v2518
    %v2556 = vpack.c.b16 %v2521, %v2520
    %v2557 = vpack.c.b16 %v2523, %v2522
    %v2558 = vpack.c.b16 %v2525, %v2524
    %v2559 = vpack.c.b16 %v2527, %v2526
    %v2560 = vpack.c.b16 %v2529, %v2528
    %v2561 = vpack.c.b16 %v2531, %v2530
    %v2562 = vpack.c.b16 %v2533, %v2532
    %v2563 = vpack.c.b16 %v2535, %v2534
    %v2564 = vpack.c.b16 %v2537, %v2536
    %v2565 = vpack.c.b16 %v2539, %v2538
    %v2566 = vpack.c.b16 %v2541, %v2540
    %v2567 = vpack.c.b16 %v2543, %v2542
    %2592 = vmatpush.bf16.msra.mxu0 %v2551
    %2593 = vmatpush.bf16.msra.mxu0 %v2550
    %2594 = vmatpush.bf16.msra.mxu0 %v2549
    %2595 = vmatpush.bf16.msra.mxu0 %v2548
    %2596 = vmatpush.bf16.msra.mxu0 %v2547
    %2597 = vmatpush.bf16.msra.mxu0 %v2546
    %2598 = vmatpush.bf16.msra.mxu0 %v2545
    %2599 = vmatpush.bf16.msra.mxu0 %v2544
    %2600 = vmatmul.bf16.gmra.mxu0 %v1548
    %v2601 = vpop.f32.mrf.mxu0
    %v2602 = vadd.f32 %v2446, %v2601
    %v2603 = vpop.f32.mrf.mxu0
    %v2604 = vadd.f32 %v2446, %v2603
    %2605 = vdwg.mxu0
    %2606 = vmatpush.bf16.msra.mxu0 %v2559
    %2607 = vmatpush.bf16.msra.mxu0 %v2558
    %2608 = vmatpush.bf16.msra.mxu0 %v2557
    %2609 = vmatpush.bf16.msra.mxu0 %v2556
    %2610 = vmatpush.bf16.msra.mxu0 %v2555
    %2611 = vmatpush.bf16.msra.mxu0 %v2554
    %2612 = vmatpush.bf16.msra.mxu0 %v2553
    %2613 = vmatpush.bf16.msra.mxu0 %v2552
    %2614 = vmatmul.bf16.gmra.mxu0 %v1549
    %v2615 = vpop.f32.mrf.mxu0
    %v2616 = vadd.f32 %v2602, %v2615
    %v2617 = vpop.f32.mrf.mxu0
    %v2618 = vadd.f32 %v2604, %v2617
    %2619 = vdwg.mxu0
    %2620 = vmatpush.bf16.msra.mxu0 %v2567
    %2621 = vmatpush.bf16.msra.mxu0 %v2566
    %2622 = vmatpush.bf16.msra.mxu0 %v2565
    %2623 = vmatpush.bf16.msra.mxu0 %v2564
    %2624 = vmatpush.bf16.msra.mxu0 %v2563
    %2625 = vmatpush.bf16.msra.mxu0 %v2562
    %2626 = vmatpush.bf16.msra.mxu0 %v2561
    %2627 = vmatpush.bf16.msra.mxu0 %v2560
    %2628 = vmatmul.bf16.gmra.mxu0 %v1550
    %v2629 = vpop.f32.mrf.mxu0
    %v2630 = vadd.f32 %v2616, %v2629
    %v2631 = vpop.f32.mrf.mxu0
    %v2632 = vadd.f32 %v2618, %v2631
    %2633 = vdwg.mxu0
    %v2634 = vld [vmem:[#allocation14] sm:$0xf]
    %v2635 = vld [vmem:[#allocation14 + $0x4] sm:$0xf]
    %v2636 = vld [vmem:[#allocation14 + $0x8] sm:$0xf]
    %v2637 = vld [vmem:[#allocation14 + $0xc] sm:$0xf]
    %v2638 = vld [vmem:[#allocation14 + $0x10] sm:$0xf]
    %v2639 = vld [vmem:[#allocation14 + $0x14] sm:$0xf]
    %v2640 = vld [vmem:[#allocation14 + $0x18] sm:$0xf]
    %v2641 = vld [vmem:[#allocation14 + $0x1c] sm:$0xf]
    %v2642 = vld [vmem:[#allocation14 + $0x20] sm:$0xf]
    %v2643 = vld [vmem:[#allocation14 + $0x24] sm:$0xf]
    %v2644 = vld [vmem:[#allocation14 + $0x28] sm:$0xf]
    %v2645 = vld [vmem:[#allocation14 + $0x2c] sm:$0xf]
    %v2646 = vld [vmem:[#allocation14 + $0x30] sm:$0xf]
    %v2647 = vld [vmem:[#allocation14 + $0x34] sm:$0xf]
    %v2648 = vld [vmem:[#allocation14 + $0x38] sm:$0xf]
    %v2649 = vld [vmem:[#allocation14 + $0x3c] sm:$0xf]
    %v2650 = vld [vmem:[#allocation14 + $0x40] sm:$0xf]
    %v2651 = vld [vmem:[#allocation14 + $0x44] sm:$0xf]
    %v2652 = vld [vmem:[#allocation14 + $0x48] sm:$0xf]
    %v2653 = vld [vmem:[#allocation14 + $0x4c] sm:$0xf]
    %v2654 = vld [vmem:[#allocation14 + $0x50] sm:$0xf]
    %v2655 = vld [vmem:[#allocation14 + $0x54] sm:$0xf]
    %v2656 = vld [vmem:[#allocation14 + $0x58] sm:$0xf]
    %v2657 = vld [vmem:[#allocation14 + $0x5c] sm:$0xf]
    %v2658 = vld [vmem:[#allocation14 + $0x60] sm:$0xf]
    %v2659 = vld [vmem:[#allocation14 + $0x64] sm:$0xf]
    %v2660 = vld [vmem:[#allocation14 + $0x68] sm:$0xf]
    %v2661 = vld [vmem:[#allocation14 + $0x6c] sm:$0xf]
    %v2662 = vld [vmem:[#allocation14 + $0x70] sm:$0xf]
    %v2663 = vld [vmem:[#allocation14 + $0x74] sm:$0xf]
    %v2664 = vld [vmem:[#allocation14 + $0x78] sm:$0xf]
    %v2665 = vld [vmem:[#allocation14 + $0x7c] sm:$0xf]
    %v2666 = vld [vmem:[#allocation14 + $0x80] sm:$0xf]
    %v2667 = vld [vmem:[#allocation14 + $0x84] sm:$0xf]
    %v2668 = vld [vmem:[#allocation14 + $0x88] sm:$0xf]
    %v2669 = vld [vmem:[#allocation14 + $0x8c] sm:$0xf]
    %v2670 = vld [vmem:[#allocation14 + $0x90] sm:$0xf]
    %v2671 = vld [vmem:[#allocation14 + $0x94] sm:$0xf]
    %v2672 = vld [vmem:[#allocation14 + $0x98] sm:$0xf]
    %v2673 = vld [vmem:[#allocation14 + $0x9c] sm:$0xf]
    %v2674 = vld [vmem:[#allocation14 + $0xa0] sm:$0xf]
    %v2675 = vld [vmem:[#allocation14 + $0xa4] sm:$0xf]
    %v2676 = vld [vmem:[#allocation14 + $0xa8] sm:$0xf]
    %v2677 = vld [vmem:[#allocation14 + $0xac] sm:$0xf]
    %v2678 = vld [vmem:[#allocation14 + $0xb0] sm:$0xf]
    %v2679 = vld [vmem:[#allocation14 + $0xb4] sm:$0xf]
    %v2680 = vld [vmem:[#allocation14 + $0xb8] sm:$0xf]
    %v2681 = vld [vmem:[#allocation14 + $0xbc] sm:$0xf]
    %v2730 = vunpack.c.l.b16 %v2634
    %v2731 = vunpack.c.l.b16 %v2635
    %v2732 = vunpack.c.l.b16 %v2636
    %v2733 = vunpack.c.l.b16 %v2637
    %v2734 = vunpack.c.l.b16 %v2638
    %v2735 = vunpack.c.l.b16 %v2639
    %v2736 = vunpack.c.l.b16 %v2640
    %v2737 = vunpack.c.l.b16 %v2641
    %v2738 = vunpack.c.l.b16 %v2642
    %v2739 = vunpack.c.l.b16 %v2643
    %v2740 = vunpack.c.l.b16 %v2644
    %v2741 = vunpack.c.l.b16 %v2645
    %v2742 = vunpack.c.l.b16 %v2646
    %v2743 = vunpack.c.l.b16 %v2647
    %v2744 = vunpack.c.l.b16 %v2648
    %v2745 = vunpack.c.l.b16 %v2649
    %v2746 = vunpack.c.l.b16 %v2650
    %v2747 = vunpack.c.l.b16 %v2651
    %v2748 = vunpack.c.l.b16 %v2652
    %v2749 = vunpack.c.l.b16 %v2653
    %v2750 = vunpack.c.l.b16 %v2654
    %v2751 = vunpack.c.l.b16 %v2655
    %v2752 = vunpack.c.l.b16 %v2656
    %v2753 = vunpack.c.l.b16 %v2657
    %v2754 = vunpack.c.l.b16 %v2658
    %v2755 = vunpack.c.l.b16 %v2659
    %v2756 = vunpack.c.l.b16 %v2660
    %v2757 = vunpack.c.l.b16 %v2661
    %v2758 = vunpack.c.l.b16 %v2662
    %v2759 = vunpack.c.l.b16 %v2663
    %v2760 = vunpack.c.l.b16 %v2664
    %v2761 = vunpack.c.l.b16 %v2665
    %v2762 = vunpack.c.l.b16 %v2666
    %v2763 = vunpack.c.l.b16 %v2667
    %v2764 = vunpack.c.l.b16 %v2668
    %v2765 = vunpack.c.l.b16 %v2669
    %v2766 = vunpack.c.l.b16 %v2670
    %v2767 = vunpack.c.l.b16 %v2671
    %v2768 = vunpack.c.l.b16 %v2672
    %v2769 = vunpack.c.l.b16 %v2673
    %v2770 = vunpack.c.l.b16 %v2674
    %v2771 = vunpack.c.l.b16 %v2675
    %v2772 = vunpack.c.l.b16 %v2676
    %v2773 = vunpack.c.l.b16 %v2677
    %v2774 = vunpack.c.l.b16 %v2678
    %v2775 = vunpack.c.l.b16 %v2679
    %v2776 = vunpack.c.l.b16 %v2680
    %v2777 = vunpack.c.l.b16 %v2681
    %v2778 = vpack.c.b16 %v2731, %v2730
    %v2779 = vpack.c.b16 %v2733, %v2732
    %v2780 = vpack.c.b16 %v2735, %v2734
    %v2781 = vpack.c.b16 %v2737, %v2736
    %v2782 = vpack.c.b16 %v2739, %v2738
    %v2783 = vpack.c.b16 %v2741, %v2740
    %v2784 = vpack.c.b16 %v2743, %v2742
    %v2785 = vpack.c.b16 %v2745, %v2744
    %v2786 = vpack.c.b16 %v2747, %v2746
    %v2787 = vpack.c.b16 %v2749, %v2748
    %v2788 = vpack.c.b16 %v2751, %v2750
    %v2789 = vpack.c.b16 %v2753, %v2752
    %v2790 = vpack.c.b16 %v2755, %v2754
    %v2791 = vpack.c.b16 %v2757, %v2756
    %v2792 = vpack.c.b16 %v2759, %v2758
    %v2793 = vpack.c.b16 %v2761, %v2760
    %v2794 = vpack.c.b16 %v2763, %v2762
    %v2795 = vpack.c.b16 %v2765, %v2764
    %v2796 = vpack.c.b16 %v2767, %v2766
    %v2797 = vpack.c.b16 %v2769, %v2768
    %v2798 = vpack.c.b16 %v2771, %v2770
    %v2799 = vpack.c.b16 %v2773, %v2772
    %v2800 = vpack.c.b16 %v2775, %v2774
    %v2801 = vpack.c.b16 %v2777, %v2776
    %2826 = vmatpush.bf16.msra.mxu0 %v2785
    %2827 = vmatpush.bf16.msra.mxu0 %v2784
    %2828 = vmatpush.bf16.msra.mxu0 %v2783
    %2829 = vmatpush.bf16.msra.mxu0 %v2782
    %2830 = vmatpush.bf16.msra.mxu0 %v2781
    %2831 = vmatpush.bf16.msra.mxu0 %v2780
    %2832 = vmatpush.bf16.msra.mxu0 %v2779
    %2833 = vmatpush.bf16.msra.mxu0 %v2778
    %2834 = vmatmul.bf16.gmra.mxu0 %v2393
    %v2835 = vpop.f32.mrf.mxu0
    %v2836 = vadd.f32 0.0, %v2835
    %v2837 = vpop.f32.mrf.mxu0
    %v2838 = vadd.f32 0.0, %v2837
    %2839 = vdwg.mxu0
    %2840 = vmatpush.bf16.msra.mxu0 %v2793
    %2841 = vmatpush.bf16.msra.mxu0 %v2792
    %2842 = vmatpush.bf16.msra.mxu0 %v2791
    %2843 = vmatpush.bf16.msra.mxu0 %v2790
    %2844 = vmatpush.bf16.msra.mxu0 %v2789
    %2845 = vmatpush.bf16.msra.mxu0 %v2788
    %2846 = vmatpush.bf16.msra.mxu0 %v2787
    %2847 = vmatpush.bf16.msra.mxu0 %v2786
    %2848 = vmatmul.bf16.gmra.mxu0 %v2394
    %v2849 = vpop.f32.mrf.mxu0
    %v2850 = vadd.f32 %v2836, %v2849
    %v2851 = vpop.f32.mrf.mxu0
    %v2852 = vadd.f32 %v2838, %v2851
    %2853 = vdwg.mxu0
    %2854 = vmatpush.bf16.msra.mxu0 %v2801
    %2855 = vmatpush.bf16.msra.mxu0 %v2800
    %2856 = vmatpush.bf16.msra.mxu0 %v2799
    %2857 = vmatpush.bf16.msra.mxu0 %v2798
    %2858 = vmatpush.bf16.msra.mxu0 %v2797
    %2859 = vmatpush.bf16.msra.mxu0 %v2796
    %2860 = vmatpush.bf16.msra.mxu0 %v2795
    %2861 = vmatpush.bf16.msra.mxu0 %v2794
    %2862 = vmatmul.bf16.gmra.mxu0 %v2395
    %v2863 = vpop.f32.mrf.mxu0
    %v2864 = vadd.f32 %v2850, %v2863
    %v2865 = vpop.f32.mrf.mxu0
    %v2866 = vadd.f32 %v2852, %v2865
    %2867 = vdwg.mxu0
    %v2868 = vadd.f32 %v2630, %v2864
    %v2869 = vadd.f32 %v2632, %v2866
    %v2870 = vld [vmem:[%s10] sm:$0x1]
    %v2872 = vperm.slane %v2870, 0
    %v2874 = vadd.f32 %v2868, %v2872
    %v2875 = vadd.f32 %v2869, %v2872
    %2876 = vst [vmem:[#allocation16] sm:$0xff] %v2874
    %2877 = vst [vmem:[#allocation16 + $0x8] sm:$0xff] %v2875
    // Predicated region
    $region78: #{tpu_custom_call.1} parent=1 // pred_check
      _
    $region79: #{tpu_custom_call.1} parent=1 // pred_check_branch
      %2879 = sbr.rel (0) target = $region81
    $region80: #{tpu_custom_call.1} parent=1 // pred_region
      %2881 = vsyncadd [#allocation4], 0
      %s2882 = sshll.u32 [#allocation16], 4
      %s2883 = int_to_ptr.vmem [resolvable:$true] %s2882
      %s2884 = sshll.u32 %s11, 4
      %s2885 = int_to_ptr.hbm [resolvable:$true] %s2884
      %2890 = dma.vmem_to_hbm [thread:$0]  %s2883, 256, %s2885, [#allocation4], 128, 128, 8
    $region81: #{tpu_custom_call.1} parent=1 // pred_fallthru
      _
    // Predicated region
    $region82: #{tpu_custom_call.1} parent=1 // pred_check
      _
    $region83: #{tpu_custom_call.1} parent=1 // pred_check_branch
      %2892 = sbr.rel (0) target = $region85
    $region84: #{tpu_custom_call.1} parent=1 // pred_region
      %2894 = dma.done [#allocation4], 256
    $region85: #{tpu_custom_call.1} parent=1 // pred_fallthru
      _
    %2895 = vsyncpa [#allocation3], 1
    %2896 = vsyncpa [#allocation6], 1
    %2897 = vsyncpa [#allocation9], 1
    %2898 = vsyncpa [#allocation12], 1
    %2899 = vsyncpa [#allocation15], 1
    %2900 = vsyncpa [#allocation4], 1

</llo_original>
